<compile_context>
chip_gen: v6e
topology: v6e:2x2x1
jax: 0.10.0
libtpu: 0.0.40
codegen_flags: <defaults>
</compile_context>

<pallas_src>
import jax
import jax.numpy as jnp
from jax.experimental import pallas as pl
from jax.experimental.pallas import tpu as pltpu


def rope_kernel(sin2_ref, cos2_ref, q_ref, k_ref, q_out_ref, k_out_ref):
    """One (batch, seq-tile) grid step.

    q_ref / k_ref blocks are (TS, H, D) with the feature axis already
    de-interleaved to [even | odd] (D on the lane axis, lane-dense).
    sin2 / cos2 blocks are (TS, D): cos2 = [cos | cos], sin2 = [-sin | sin].
    """
    cos2 = cos2_ref[...].astype(jnp.float32)[:, None, :]   # (TS, 1, D)
    sin2 = sin2_ref[...].astype(jnp.float32)[:, None, :]
    D = q_ref.shape[-1]
    half = D // 2

    def rotate(x_ref, out_ref):
        x = x_ref[...].astype(jnp.float32)                  # (TS, H, D)
        if D % 128 == 0:
            # Lane-dense rotate-half: one XLU roll, full-width VPU math,
            # single unmasked full-width store.
            x_swap = pltpu.roll(x, shift=half, axis=2)      # [odd | even]
            out_ref[...] = (x * cos2 + x_swap * sin2).astype(out_ref.dtype)
        else:
            # D not a lane multiple: static half-slices + two static-offset
            # stores into the full-width output block (no concat temporary).
            cos = cos2[:, :, :half]
            sin = sin2[:, :, half:]
            e = x[:, :, :half]
            o = x[:, :, half:]
            out_ref[:, :, :half] = (e * cos - o * sin).astype(out_ref.dtype)
            out_ref[:, :, half:] = (o * cos + e * sin).astype(out_ref.dtype)

    rotate(q_ref, q_out_ref)
    rotate(k_ref, k_out_ref)


def _vmem_plan(B, S, H, D, itemsize):
    """Per-generation VMEM budget -> (seq_tile, vmem_limit_bytes)."""
    try:
        cap = pltpu.get_tpu_info().vmem_capacity_bytes
    except Exception:
        cap = 64 * 1024 * 1024            # conservative (v7x-sized) fallback
    # Scoped limit: ~40 MiB on v7x (64 MiB physical), 80 MiB on v5e/v6e (128 MiB).
    vmem_limit = int(min(cap * 5 // 8, 80 * 1024 * 1024))
    block_budget = vmem_limit // 2        # headroom for Mosaic scratch
    # Pinned per seq row: q,k in + q,k out blocks, double-buffered
    # (8 * itemsize), plus ~4 f32 compute temporaries per tensor (16 bytes).
    per_row = H * D * (8 * itemsize + 16)
    ts = max(8, int(block_budget // per_row))
    # Megacore (v7x has 2 TCs): keep >= ~8 grid steps when the problem is big
    # enough, so both cores get work even at B=1 prefill.
    if B * S >= 64:
        ts = min(ts, max(8, (B * S) // 8))
    if ts >= S:
        return S, vmem_limit
    return max(8, (ts // 8) * 8), vmem_limit   # sublane-align the table block


def init_rope_tables(head_dim, seq_len):
    """Deterministic sin/cos tables, matching PosEncoding.init_rope_matrix."""
    half = head_dim // 2
    theta = 10000.0 ** (-jnp.arange(half, dtype=jnp.float32) / half)
    pos = jnp.arange(seq_len, dtype=jnp.float32)[:, None]
    angles = pos * theta                      # (seq_len, half)
    return jnp.sin(angles), jnp.cos(angles)


@jax.jit
def pos_encoding_forward(q, k, sin_emb, cos_emb):
    B, S, H, D = q.shape
    half = D // 2
    assert k.shape == q.shape
    assert D % 2 == 0
    assert sin_emb.shape[0] >= S and sin_emb.shape[1] == half

    # Even/odd de-interleave: ONE lane-dense operand per tensor (not four
    # half-width strided operands).  allow_input_fusion below lets XLA try to
    # fold this into the pallas_call input instead of materializing a copy.
    q_d = jnp.concatenate([q[..., 0::2], q[..., 1::2]], axis=-1)
    k_d = jnp.concatenate([k[..., 0::2], k[..., 1::2]], axis=-1)

    # Full-D-width tables (tiny): cos2 = [cos | cos], sin2 = [-sin | sin].
    sin = sin_emb[:S].astype(jnp.float32)
    cos = cos_emb[:S].astype(jnp.float32)
    cos2 = jnp.concatenate([cos, cos], axis=-1)
    sin2 = jnp.concatenate([-sin, sin], axis=-1)

    itemsize = jnp.dtype(q.dtype).itemsize
    ts, vmem_limit = _vmem_plan(B, S, H, D, itemsize)
    grid = (B, pl.cdiv(S, ts))

    x_spec = pl.BlockSpec((None, ts, H, D), lambda b, s: (b, s, 0, 0))
    tbl_spec = pl.BlockSpec((ts, D), lambda b, s: (s, 0))

    flops = 6 * B * S * H * D                       # 2 mul + 1 add per out elem
    bytes_accessed = 4 * B * S * H * D * itemsize + 2 * S * D * 4

    q_rot, k_rot = pl.pallas_call(
        rope_kernel,
        out_shape=(jax.ShapeDtypeStruct((B, S, H, D), q.dtype),
                   jax.ShapeDtypeStruct((B, S, H, D), k.dtype)),
        grid=grid,
        in_specs=[tbl_spec, tbl_spec, x_spec, x_spec],
        out_specs=(x_spec, x_spec),
        compiler_params=pltpu.CompilerParams(
            dimension_semantics=("parallel", "parallel"),
            vmem_limit_bytes=vmem_limit,
            allow_input_fusion=[False, False, True, True],
        ),
        cost_estimate=pl.CostEstimate(
            flops=flops, transcendentals=0, bytes_accessed=bytes_accessed),
    )(sin2, cos2, q_d, k_d)
    return q_rot, k_rot


def pos_encoding_reference(q, k, sin_emb, cos_emb):
    """Pure-JAX reference mirroring the PyTorch forward, for verification."""
    B, S, H, D = q.shape
    sin = sin_emb[:S][None, :, None, :]
    cos = cos_emb[:S][None, :, None, :]
    qe, qo = q[..., 0::2], q[..., 1::2]
    ke, ko = k[..., 0::2], k[..., 1::2]
    q_rot = jnp.concatenate([qe * cos - qo * sin, qo * cos + qe * sin], -1)
    k_rot = jnp.concatenate([ke * cos - ko * sin, ko * cos + ke * sin], -1)
    return q_rot, k_rot


if __name__ == "__main__":
    def run_case(batch, seq, heads, head_dim, max_seq_len):
        key = jax.random.PRNGKey(0)
        kq, kk = jax.random.split(key)
        q = jax.random.normal(kq, (batch, seq, heads, head_dim), jnp.float32)
        k = jax.random.normal(kk, (batch, seq, heads, head_dim), jnp.float32)
        sin_emb, cos_emb = init_rope_tables(head_dim, max_seq_len)

        q_rot, k_rot = pos_encoding_forward(q, k, sin_emb, cos_emb)
        jax.block_until_ready((q_rot, k_rot))

        q_ref, k_ref = pos_encoding_reference(q, k, sin_emb, cos_emb)
        assert q_rot.shape == q.shape and k_rot.shape == k.shape
        assert jnp.allclose(q_rot, q_ref, atol=1e-5, rtol=1e-5)
        assert jnp.allclose(k_rot, k_ref, atol=1e-5, rtol=1e-5)

    # Small module-like shape (D=32 -> static half-slice store path).
    run_case(batch=2, seq=8, heads=4, head_dim=32, max_seq_len=16)
    # Lane-dense shape (D=128 -> rotate-half / pltpu.roll path).
    run_case(batch=2, seq=16, heads=4, head_dim=128, max_seq_len=16)

    print("KERNEL_OK")
</pallas_src>

<mosaic_0001>
module attributes {stable_mosaic.version = 11 : i64} {
  func.func @rope_kernel(%arg0: i32, %arg1: i32, %arg2: memref<8x32xf32, #tpu.memory_space<vmem>>, %arg3: memref<8x32xf32, #tpu.memory_space<vmem>>, %arg4: memref<1x8x4x32xf32, #tpu.memory_space<vmem>>, %arg5: memref<1x8x4x32xf32, #tpu.memory_space<vmem>>, %arg6: memref<1x8x4x32xf32, #tpu.memory_space<vmem>>, %arg7: memref<1x8x4x32xf32, #tpu.memory_space<vmem>>) attributes {dimension_semantics = [#tpu.dimension_semantics<parallel>, #tpu.dimension_semantics<parallel>], iteration_bounds = array<i64: 2, 1>, scalar_prefetch = 0 : i64, scratch_operands = 0 : i64, tpu.core_type = #tpu.core_type<tc>, window_params = [{transform_indices = @transform_0, window_bounds = array<i64: 8, 32>}, {transform_indices = @transform_1, window_bounds = array<i64: 8, 32>}, {transform_indices = @transform_2, window_bounds = array<i64: 1, 8, 4, 32>}, {transform_indices = @transform_3, window_bounds = array<i64: 1, 8, 4, 32>}, {transform_indices = @transform_4, window_bounds = array<i64: 1, 8, 4, 32>}, {transform_indices = @transform_5, window_bounds = array<i64: 1, 8, 4, 32>}]} {
    %c0 = arith.constant 0 : index
    %c0_0 = arith.constant 0 : index
    %0 = vector.load %arg3[%c0, %c0_0] : memref<8x32xf32, #tpu.memory_space<vmem>>, vector<8x32xf32>
    %1 = vector.shape_cast %0 : vector<8x32xf32> to vector<8x1x32xf32>
    %c0_1 = arith.constant 0 : index
    %c0_2 = arith.constant 0 : index
    %2 = vector.load %arg2[%c0_1, %c0_2] : memref<8x32xf32, #tpu.memory_space<vmem>>, vector<8x32xf32>
    %3 = vector.shape_cast %2 : vector<8x32xf32> to vector<8x1x32xf32>
    %c0_3 = arith.constant 0 : index
    %c0_4 = arith.constant 0 : index
    %c0_5 = arith.constant 0 : index
    %c0_6 = arith.constant 0 : index
    %4 = vector.load %arg4[%c0_3, %c0_4, %c0_5, %c0_6] : memref<1x8x4x32xf32, #tpu.memory_space<vmem>>, vector<1x8x4x32xf32>
    %5 = vector.shape_cast %4 : vector<1x8x4x32xf32> to vector<8x4x32xf32>
    %6 = vector.extract_strided_slice %1 {offsets = [0, 0, 0], sizes = [8, 1, 16], strides = [1, 1, 1]} : vector<8x1x32xf32> to vector<8x1x16xf32>
    %7 = vector.extract_strided_slice %3 {offsets = [0, 0, 16], sizes = [8, 1, 16], strides = [1, 1, 1]} : vector<8x1x32xf32> to vector<8x1x16xf32>
    %8 = vector.extract_strided_slice %5 {offsets = [0, 0, 0], sizes = [8, 4, 16], strides = [1, 1, 1]} : vector<8x4x32xf32> to vector<8x4x16xf32>
    %9 = vector.extract_strided_slice %5 {offsets = [0, 0, 16], sizes = [8, 4, 16], strides = [1, 1, 1]} : vector<8x4x32xf32> to vector<8x4x16xf32>
    %10 = vector.broadcast %6 : vector<8x1x16xf32> to vector<8x4x16xf32>
    %11 = arith.mulf %8, %10 : vector<8x4x16xf32>
    %12 = vector.broadcast %7 : vector<8x1x16xf32> to vector<8x4x16xf32>
    %13 = arith.mulf %9, %12 : vector<8x4x16xf32>
    %14 = arith.subf %11, %13 : vector<8x4x16xf32>
    %c0_7 = arith.constant 0 : index
    %c0_8 = arith.constant 0 : index
    %c0_9 = arith.constant 0 : index
    %c0_10 = arith.constant 0 : index
    %15 = vector.load %arg6[%c0_7, %c0_8, %c0_9, %c0_10] : memref<1x8x4x32xf32, #tpu.memory_space<vmem>>, vector<1x8x4x16xf32>
    %16 = vector.shape_cast %15 : vector<1x8x4x16xf32> to vector<8x4x16xf32>
    %17 = vector.shape_cast %14 : vector<8x4x16xf32> to vector<1x8x4x16xf32>
    tpu.vector_store %arg6[%c0_7, %c0_8, %c0_9, %c0_10], %17 {strides = array<i32>} : memref<1x8x4x32xf32, #tpu.memory_space<vmem>>, vector<1x8x4x16xf32>,
    %18 = vector.broadcast %6 : vector<8x1x16xf32> to vector<8x4x16xf32>
    %19 = arith.mulf %9, %18 : vector<8x4x16xf32>
    %20 = vector.broadcast %7 : vector<8x1x16xf32> to vector<8x4x16xf32>
    %21 = arith.mulf %8, %20 : vector<8x4x16xf32>
    %22 = arith.addf %19, %21 : vector<8x4x16xf32>
    %c0_11 = arith.constant 0 : index
    %c0_12 = arith.constant 0 : index
    %c0_13 = arith.constant 0 : index
    %c16 = arith.constant 16 : index
    %23 = vector.load %arg6[%c0_11, %c0_12, %c0_13, %c16] : memref<1x8x4x32xf32, #tpu.memory_space<vmem>>, vector<1x8x4x16xf32>
    %24 = vector.shape_cast %23 : vector<1x8x4x16xf32> to vector<8x4x16xf32>
    %25 = vector.shape_cast %22 : vector<8x4x16xf32> to vector<1x8x4x16xf32>
    tpu.vector_store %arg6[%c0_11, %c0_12, %c0_13, %c16], %25 {strides = array<i32>} : memref<1x8x4x32xf32, #tpu.memory_space<vmem>>, vector<1x8x4x16xf32>,
    %c0_14 = arith.constant 0 : index
    %c0_15 = arith.constant 0 : index
    %c0_16 = arith.constant 0 : index
    %c0_17 = arith.constant 0 : index
    %26 = vector.load %arg5[%c0_14, %c0_15, %c0_16, %c0_17] : memref<1x8x4x32xf32, #tpu.memory_space<vmem>>, vector<1x8x4x32xf32>
    %27 = vector.shape_cast %26 : vector<1x8x4x32xf32> to vector<8x4x32xf32>
    %28 = vector.extract_strided_slice %1 {offsets = [0, 0, 0], sizes = [8, 1, 16], strides = [1, 1, 1]} : vector<8x1x32xf32> to vector<8x1x16xf32>
    %29 = vector.extract_strided_slice %3 {offsets = [0, 0, 16], sizes = [8, 1, 16], strides = [1, 1, 1]} : vector<8x1x32xf32> to vector<8x1x16xf32>
    %30 = vector.extract_strided_slice %27 {offsets = [0, 0, 0], sizes = [8, 4, 16], strides = [1, 1, 1]} : vector<8x4x32xf32> to vector<8x4x16xf32>
    %31 = vector.extract_strided_slice %27 {offsets = [0, 0, 16], sizes = [8, 4, 16], strides = [1, 1, 1]} : vector<8x4x32xf32> to vector<8x4x16xf32>
    %32 = vector.broadcast %28 : vector<8x1x16xf32> to vector<8x4x16xf32>
    %33 = arith.mulf %30, %32 : vector<8x4x16xf32>
    %34 = vector.broadcast %29 : vector<8x1x16xf32> to vector<8x4x16xf32>
    %35 = arith.mulf %31, %34 : vector<8x4x16xf32>
    %36 = arith.subf %33, %35 : vector<8x4x16xf32>
    %c0_18 = arith.constant 0 : index
    %c0_19 = arith.constant 0 : index
    %c0_20 = arith.constant 0 : index
    %c0_21 = arith.constant 0 : index
    %37 = vector.load %arg7[%c0_18, %c0_19, %c0_20, %c0_21] : memref<1x8x4x32xf32, #tpu.memory_space<vmem>>, vector<1x8x4x16xf32>
    %38 = vector.shape_cast %37 : vector<1x8x4x16xf32> to vector<8x4x16xf32>
    %39 = vector.shape_cast %36 : vector<8x4x16xf32> to vector<1x8x4x16xf32>
    tpu.vector_store %arg7[%c0_18, %c0_19, %c0_20, %c0_21], %39 {strides = array<i32>} : memref<1x8x4x32xf32, #tpu.memory_space<vmem>>, vector<1x8x4x16xf32>,
    %40 = vector.broadcast %28 : vector<8x1x16xf32> to vector<8x4x16xf32>
    %41 = arith.mulf %31, %40 : vector<8x4x16xf32>
    %42 = vector.broadcast %29 : vector<8x1x16xf32> to vector<8x4x16xf32>
    %43 = arith.mulf %30, %42 : vector<8x4x16xf32>
    %44 = arith.addf %41, %43 : vector<8x4x16xf32>
    %c0_22 = arith.constant 0 : index
    %c0_23 = arith.constant 0 : index
    %c0_24 = arith.constant 0 : index
    %c16_25 = arith.constant 16 : index
    %45 = vector.load %arg7[%c0_22, %c0_23, %c0_24, %c16_25] : memref<1x8x4x32xf32, #tpu.memory_space<vmem>>, vector<1x8x4x16xf32>
    %46 = vector.shape_cast %45 : vector<1x8x4x16xf32> to vector<8x4x16xf32>
    %47 = vector.shape_cast %44 : vector<8x4x16xf32> to vector<1x8x4x16xf32>
    tpu.vector_store %arg7[%c0_22, %c0_23, %c0_24, %c16_25], %47 {strides = array<i32>} : memref<1x8x4x32xf32, #tpu.memory_space<vmem>>, vector<1x8x4x16xf32>,
    return
  }
  func.func @transform_0(%arg0: i32, %arg1: i32) -> (i32, i32) {
    %c0_i32 = arith.constant 0 : i32
    %c0_i32_0 = arith.constant 0 : i32
    return %arg1, %c0_i32 : i32, i32
  }
  func.func @transform_1(%arg0: i32, %arg1: i32) -> (i32, i32) {
    %c0_i32 = arith.constant 0 : i32
    %c0_i32_0 = arith.constant 0 : i32
    return %arg1, %c0_i32 : i32, i32
  }
  func.func @transform_2(%arg0: i32, %arg1: i32) -> (i32, i32, i32, i32) {
    %c0_i32 = arith.constant 0 : i32
    %c0_i32_0 = arith.constant 0 : i32
    %c0_i32_1 = arith.constant 0 : i32
    return %arg0, %arg1, %c0_i32, %c0_i32_0 : i32, i32, i32, i32
  }
  func.func @transform_3(%arg0: i32, %arg1: i32) -> (i32, i32, i32, i32) {
    %c0_i32 = arith.constant 0 : i32
    %c0_i32_0 = arith.constant 0 : i32
    %c0_i32_1 = arith.constant 0 : i32
    return %arg0, %arg1, %c0_i32, %c0_i32_0 : i32, i32, i32, i32
  }
  func.func @transform_4(%arg0: i32, %arg1: i32) -> (i32, i32, i32, i32) {
    %c0_i32 = arith.constant 0 : i32
    %c0_i32_0 = arith.constant 0 : i32
    %c0_i32_1 = arith.constant 0 : i32
    return %arg0, %arg1, %c0_i32, %c0_i32_0 : i32, i32, i32, i32
  }
  func.func @transform_5(%arg0: i32, %arg1: i32) -> (i32, i32, i32, i32) {
    %c0_i32 = arith.constant 0 : i32
    %c0_i32_0 = arith.constant 0 : i32
    %c0_i32_1 = arith.constant 0 : i32
    return %arg0, %arg1, %c0_i32, %c0_i32_0 : i32, i32, i32, i32
  }
}

</mosaic_0001>

<llo_original>
// kernel: pos_encoding_forward.2
$region0: #{pos_encoding_forward.2}
  #allocation0 [shape = 'u32[]', space=smem, size = 0x4, offset = 0x4, fixed_abs, tag = 'smem constant byte address 0x4 - core index']
  #allocation1 [shape = 'u32[144,128]{1,0:T(1,128)}', space=vmem, size = 0x12000, scoped, tag = 'internal scratch']
  #allocation2 [shape = 'u32[2048]{0}', space=vmem, size = 0x2000, scoped, tag = 'scoped memory for pos_encoding_forward.2']
  #allocation3 [shape = 'u32[2048]{0}', space=vmem, size = 0x2000, scoped, tag = 'scoped memory for pos_encoding_forward.2']
  #allocation4 [shape = 'u32[2048]{0}', space=vmem, size = 0x2000, scoped, tag = 'scoped memory for pos_encoding_forward.2']
  #allocation5 [shape = 'u32[2048]{0}', space=vmem, size = 0x2000, scoped, tag = 'scoped memory for pos_encoding_forward.2']
  #allocation6 [shape = 'u32[2048]{0}', space=vmem, size = 0x2000, scoped, tag = 'scoped memory for pos_encoding_forward.2']
  #allocation7 [shape = 'u32[2048]{0}', space=vmem, size = 0x2000, scoped, tag = 'scoped memory for pos_encoding_forward.2']
  #allocation8 [shape = 'u32[2048]{0}', space=vmem, size = 0x2000, scoped, tag = 'scoped memory for pos_encoding_forward.2']
  #allocation9 [shape = 'u32[2048]{0}', space=vmem, size = 0x2000, scoped, tag = 'scoped memory for pos_encoding_forward.2']
  #allocation10 [shape = 'u32[2048]{0}', space=vmem, size = 0x2000, scoped, tag = 'scoped memory for pos_encoding_forward.2']
  #allocation11 [shape = 'u32[2048]{0}', space=vmem, size = 0x2000, scoped, tag = 'scoped memory for pos_encoding_forward.2']
  #allocation12 [shape = 'u32[2048]{0}', space=vmem, size = 0x2000, scoped, tag = 'scoped memory for pos_encoding_forward.2']
  #allocation13 [shape = 'u32[2048]{0}', space=vmem, size = 0x2000, scoped, tag = 'scoped memory for pos_encoding_forward.2']
  #allocation14 [shape = 'u32[2048]{0}', space=vmem, size = 0x2000, scoped, tag = 'scoped memory for pos_encoding_forward.2']
  #allocation15 [shape = 'u32[2048]{0}', space=vmem, size = 0x2000, scoped, tag = 'scoped memory for pos_encoding_forward.2']
  #allocation16 [shape = 'u32[2048]{0}', space=vmem, size = 0x2000, scoped, tag = 'scoped memory for pos_encoding_forward.2']
  #allocation17 [shape = 'u32[2048]{0}', space=vmem, size = 0x2000, scoped, tag = 'scoped memory for pos_encoding_forward.2']
  #allocation18 [shape = 'u32[2048]{0}', space=vmem, size = 0x2000, scoped, tag = 'scoped memory for pos_encoding_forward.2']
  #allocation19 [shape = 'u32[2048]{0}', space=vmem, size = 0x2000, scoped, tag = 'scoped memory for pos_encoding_forward.2']
  #allocation20 [shape = 'u32[2048]{0}', space=vmem, size = 0x2000, scoped, tag = 'scoped memory for pos_encoding_forward.2']
  #allocation21 [shape = 'u32[2048]{0}', space=vmem, size = 0x2000, scoped, tag = 'scoped memory for pos_encoding_forward.2']
  %s0 = inlined_call_operand.vmem [shape: f32[8,32], index: 0, kind: input, shape index: {}]
  %s1 = inlined_call_operand.vmem [shape: f32[8,32], index: 1, kind: input, shape index: {}]
  %s2 = inlined_call_operand.vmem [shape: f32[2,8,4,16], index: 2, kind: input, shape index: {}]
  %s3 = inlined_call_operand.<no memory space> [shape: f32[], index: 3, kind: input, shape index: {}]
  %s4 = inlined_call_operand.vmem [shape: f32[2,8,4,16], index: 4, kind: input, shape index: {}]
  %s5 = inlined_call_operand.vmem [shape: f32[2,8,4,16], index: 5, kind: input, shape index: {}]
  %s6 = inlined_call_operand.vmem [shape: f32[2,8,4,16], index: 6, kind: input, shape index: {}]
  %s7 = inlined_call_operand.hbm [shape: f32[2,8,4,32], index: 7, kind: output, shape index: {0}]
  %s8 = inlined_call_operand.hbm [shape: f32[2,8,4,32], index: 8, kind: output, shape index: {1}]
  %9 = xla_tuple %s7, %s8
  %s10 = sld [smem:[#allocation0]]
  $region65: #{pos_encoding_forward.2} parent=0
    _
  %s12 = ssub.s32 1, %s10
  %s13 = scalar_select 0, %s12, %s10
  %v14 = vstv %s3
  %v15 = vstv %s3
  %v16 = vstv %s3
  %v17 = vstv %s3
  $region1: #{pos_encoding_forward.2} parent=0
    #allocation22 [shape = 'u8[32768]{0}', space=vmem, size = 0x8000, scoped, tag = 'output window, operand 0']
    #allocation23 [shape = 's32[2]{0}', space=sflag, size = 0x8, scoped, tag = 'scoped memory for pos_encoding_forward.2']
    #allocation24 [shape = 'u8[32768]{0}', space=vmem, size = 0x8000, scoped, tag = 'output window, operand 1']
    #allocation25 [shape = 's32[2]{0}', space=sflag, size = 0x8, scoped, tag = 'scoped memory for pos_encoding_forward.2']
    %18 = vsyncpa [#allocation23], 0
    %s19 = scalar_lea.sflag [#allocation23], 1
    %20 = vsyncpa %s19, 0
    %21 = vsyncpa [#allocation25], 0
    %s22 = scalar_lea.sflag [#allocation25], 1
    %23 = vsyncpa %s22, 0
    loop: start=0, step=1, limit=4
    $region2: #{pos_encoding_forward.2} parent=1 // loop_pre_header
      _
    $region3: #{pos_encoding_forward.2} parent=1 // loop_header
      %s25 = sphi 0, %s29
      %p26 = scmp.ge.s32.totalorder %s25, 4
      %s32 = sphi 0, %s44
      %s33 = sphi 0, %s40
      %s34 = sphi 0, %s32
      %s35 = sphi 0, %s33
      %s36 = sphi 0, %s34
      %s37 = sphi 0, %s35
      %s47 = sphi 0, %s49
      %s50 = sphi 0, %s47
      %s51 = sphi 0, %s50
      %s67 = sphi 0, %s51
      %s73 = sphi 0, %s75
      %s76 = sphi 0, %s73
      %s77 = sphi 0, %s76
      %s93 = sphi 0, %s77
      %s105 = sphi 0, %s107
      %s108 = sphi 0, %s105
      %s109 = sphi 0, %s108
      %s125 = sphi 0, %s109
      %s133 = sphi 0, %s135
      %s136 = sphi 0, %s133
      %s137 = sphi 0, %s136
      %s153 = sphi 0, %s137
      %s165 = sphi 0, %s167
      %s168 = sphi 0, %s165
      %s169 = sphi 0, %s168
      %s185 = sphi 0, %s169
      %s193 = sphi 0, %s195
      %s196 = sphi 0, %s193
      %s197 = sphi 0, %s196
      %s213 = sphi 0, %s197
      %s221 = sphi 0, %s223
      %s224 = sphi 0, %s221
      %s225 = sphi 0, %s224
      %s241 = sphi 0, %s225
      %s249 = sphi 0, %s251
      %s252 = sphi 0, %s249
      %s253 = sphi 0, %s252
      %s269 = sphi 0, %s253
    $region4: #{pos_encoding_forward.2} parent=1 // loop_header_branch
      %28 = sbr.rel (%p26) target = $region8
    $region5: #{pos_encoding_forward.2} parent=1 // loop_body
      %s30 = ssub.s32 %s25, 1
      %s31 = ssub.s32 %s25, 2
      %s38 = sadd.s32 1, %s33
      %p39 = scmp.ge.s32.totalorder %s38, 1
      %s40 = scalar_select %p39, 0, %s38
      %s41 = sadd.s32 1, %s32
      %s42 = scalar_select %p39, %s41, %s32
      %p43 = scmp.ge.s32.totalorder %s42, 2
      %s44 = scalar_select %p43, 0, %s42
      %s45 = ssub.s32 %s33, %s40
      %p46 = scmp.eq.s32.totalorder %s45, 0
      %s48 = sadd.s32 %s47, 1
      %s49 = scalar_select %p46, %s47, %s48
      %p52 = pneg %p46
      %p53 = scmp.eq.s32.totalorder %s25, 1
      %p54 = por %p52, %p53
      %p55 = scmp.ne.s32.totalorder %s47, %s50
      %p56 = scmp.eq.s32.totalorder %s25, 0
      %p57 = por %p55, %p56
      %p58 = scmp.ne.s32.totalorder %s47, %s50
      %p59 = scmp.eq.s32.totalorder %s30, 1
      %p60 = por %p58, %p59
      %p61 = scmp.ne.s32.totalorder %s50, %s51
      %p62 = scmp.eq.s32.totalorder %s30, 0
      %p63 = por %p61, %p62
      %p64 = scmp.ne.s32.totalorder %s50, %s51
      %p65 = scmp.eq.s32.totalorder %s31, 1
      %p66 = por %p64, %p65
      %p68 = scmp.ne.s32.totalorder %s51, %s67
      %p69 = scmp.eq.s32.totalorder %s31, 0
      %p70 = por %p68, %p69
      %s71 = ssub.s32 %s33, %s40
      %p72 = scmp.eq.s32.totalorder %s71, 0
      %s74 = sadd.s32 %s73, 1
      %s75 = scalar_select %p72, %s73, %s74
      %p78 = pneg %p72
      %p79 = scmp.eq.s32.totalorder %s25, 1
      %p80 = por %p78, %p79
      %p81 = scmp.ne.s32.totalorder %s73, %s76
      %p82 = scmp.eq.s32.totalorder %s25, 0
      %p83 = por %p81, %p82
      %p84 = scmp.ne.s32.totalorder %s73, %s76
      %p85 = scmp.eq.s32.totalorder %s30, 1
      %p86 = por %p84, %p85
      %p87 = scmp.ne.s32.totalorder %s76, %s77
      %p88 = scmp.eq.s32.totalorder %s30, 0
      %p89 = por %p87, %p88
      %p90 = scmp.ne.s32.totalorder %s76, %s77
      %p91 = scmp.eq.s32.totalorder %s31, 1
      %p92 = por %p90, %p91
      %p94 = scmp.ne.s32.totalorder %s77, %s93
      %p95 = scmp.eq.s32.totalorder %s31, 0
      %p96 = por %p94, %p95
      %s99 = ssub.s32 %s32, %s44
      %s100 = ssub.s32 %s33, %s40
      %s101 = sor.u32 %s99, %s100
      %s102 = ssub.s32 0, 0
      %s103 = sor.u32 %s101, %s102
      %p104 = scmp.eq.s32.totalorder %s103, 0
      %s106 = sadd.s32 %s105, 1
      %s107 = scalar_select %p104, %s105, %s106
      %p110 = pneg %p104
      %p111 = scmp.eq.s32.totalorder %s25, 1
      %p112 = por %p110, %p111
      %p113 = scmp.ne.s32.totalorder %s105, %s108
      %p114 = scmp.eq.s32.totalorder %s25, 0
      %p115 = por %p113, %p114
      %p116 = scmp.ne.s32.totalorder %s105, %s108
      %p117 = scmp.eq.s32.totalorder %s30, 1
      %p118 = por %p116, %p117
      %p119 = scmp.ne.s32.totalorder %s108, %s109
      %p120 = scmp.eq.s32.totalorder %s30, 0
      %p121 = por %p119, %p120
      %p122 = scmp.ne.s32.totalorder %s108, %s109
      %p123 = scmp.eq.s32.totalorder %s31, 1
      %p124 = por %p122, %p123
      %p126 = scmp.ne.s32.totalorder %s109, %s125
      %p127 = scmp.eq.s32.totalorder %s31, 0
      %p128 = por %p126, %p127
      %s129 = ssub.s32 %s32, %s44
      %s130 = ssub.s32 %s33, %s40
      %s131 = sor.u32 %s129, %s130
      %p132 = scmp.eq.s32.totalorder %s131, 0
      %s134 = sadd.s32 %s133, 1
      %s135 = scalar_select %p132, %s133, %s134
      %p138 = pneg %p132
      %p139 = scmp.eq.s32.totalorder %s25, 1
      %p140 = por %p138, %p139
      %p141 = scmp.ne.s32.totalorder %s133, %s136
      %p142 = scmp.eq.s32.totalorder %s25, 0
      %p143 = por %p141, %p142
      %p144 = scmp.ne.s32.totalorder %s133, %s136
      %p145 = scmp.eq.s32.totalorder %s30, 1
      %p146 = por %p144, %p145
      %p147 = scmp.ne.s32.totalorder %s136, %s137
      %p148 = scmp.eq.s32.totalorder %s30, 0
      %p149 = por %p147, %p148
      %p150 = scmp.ne.s32.totalorder %s136, %s137
      %p151 = scmp.eq.s32.totalorder %s31, 1
      %p152 = por %p150, %p151
      %p154 = scmp.ne.s32.totalorder %s137, %s153
      %p155 = scmp.eq.s32.totalorder %s31, 0
      %p156 = por %p154, %p155
      %s159 = ssub.s32 %s32, %s44
      %s160 = ssub.s32 %s33, %s40
      %s161 = sor.u32 %s159, %s160
      %s162 = ssub.s32 0, 0
      %s163 = sor.u32 %s161, %s162
      %p164 = scmp.eq.s32.totalorder %s163, 0
      %s166 = sadd.s32 %s165, 1
      %s167 = scalar_select %p164, %s165, %s166
      %p170 = pneg %p164
      %p171 = scmp.eq.s32.totalorder %s25, 1
      %p172 = por %p170, %p171
      %p173 = scmp.ne.s32.totalorder %s165, %s168
      %p174 = scmp.eq.s32.totalorder %s25, 0
      %p175 = por %p173, %p174
      %p176 = scmp.ne.s32.totalorder %s165, %s168
      %p177 = scmp.eq.s32.totalorder %s30, 1
      %p178 = por %p176, %p177
      %p179 = scmp.ne.s32.totalorder %s168, %s169
      %p180 = scmp.eq.s32.totalorder %s30, 0
      %p181 = por %p179, %p180
      %p182 = scmp.ne.s32.totalorder %s168, %s169
      %p183 = scmp.eq.s32.totalorder %s31, 1
      %p184 = por %p182, %p183
      %p186 = scmp.ne.s32.totalorder %s169, %s185
      %p187 = scmp.eq.s32.totalorder %s31, 0
      %p188 = por %p186, %p187
      %s189 = ssub.s32 %s32, %s44
      %s190 = ssub.s32 %s33, %s40
      %s191 = sor.u32 %s189, %s190
      %p192 = scmp.eq.s32.totalorder %s191, 0
      %s194 = sadd.s32 %s193, 1
      %s195 = scalar_select %p192, %s193, %s194
      %p198 = pneg %p192
      %p199 = scmp.eq.s32.totalorder %s25, 1
      %p200 = por %p198, %p199
      %p201 = scmp.ne.s32.totalorder %s193, %s196
      %p202 = scmp.eq.s32.totalorder %s25, 0
      %p203 = por %p201, %p202
      %p204 = scmp.ne.s32.totalorder %s193, %s196
      %p205 = scmp.eq.s32.totalorder %s30, 1
      %p206 = por %p204, %p205
      %p207 = scmp.ne.s32.totalorder %s196, %s197
      %p208 = scmp.eq.s32.totalorder %s30, 0
      %p209 = por %p207, %p208
      %p210 = scmp.ne.s32.totalorder %s196, %s197
      %p211 = scmp.eq.s32.totalorder %s31, 1
      %p212 = por %p210, %p211
      %p214 = scmp.ne.s32.totalorder %s197, %s213
      %p215 = scmp.eq.s32.totalorder %s31, 0
      %p216 = por %p214, %p215
      %s217 = ssub.s32 %s32, %s44
      %s218 = ssub.s32 %s33, %s40
      %s219 = sor.u32 %s217, %s218
      %p220 = scmp.eq.s32.totalorder %s219, 0
      %s222 = sadd.s32 %s221, 1
      %s223 = scalar_select %p220, %s221, %s222
      %p226 = pneg %p220
      %p227 = scmp.eq.s32.totalorder %s25, 1
      %p228 = por %p226, %p227
      %p229 = scmp.ne.s32.totalorder %s221, %s224
      %p230 = scmp.eq.s32.totalorder %s25, 0
      %p231 = por %p229, %p230
      %p232 = scmp.ne.s32.totalorder %s221, %s224
      %p233 = scmp.eq.s32.totalorder %s30, 1
      %p234 = por %p232, %p233
      %p235 = scmp.ne.s32.totalorder %s224, %s225
      %p236 = scmp.eq.s32.totalorder %s30, 0
      %p237 = por %p235, %p236
      %p238 = scmp.ne.s32.totalorder %s224, %s225
      %p239 = scmp.eq.s32.totalorder %s31, 1
      %p240 = por %p238, %p239
      %p242 = scmp.ne.s32.totalorder %s225, %s241
      %p243 = scmp.eq.s32.totalorder %s31, 0
      %p244 = por %p242, %p243
      %s245 = ssub.s32 %s32, %s44
      %s246 = ssub.s32 %s33, %s40
      %s247 = sor.u32 %s245, %s246
      %p248 = scmp.eq.s32.totalorder %s247, 0
      %s250 = sadd.s32 %s249, 1
      %s251 = scalar_select %p248, %s249, %s250
      %p254 = pneg %p248
      %p255 = scmp.eq.s32.totalorder %s25, 1
      %p256 = por %p254, %p255
      %p257 = scmp.ne.s32.totalorder %s249, %s252
      %p258 = scmp.eq.s32.totalorder %s25, 0
      %p259 = por %p257, %p258
      %p260 = scmp.ne.s32.totalorder %s249, %s252
      %p261 = scmp.eq.s32.totalorder %s30, 1
      %p262 = por %p260, %p261
      %p263 = scmp.ne.s32.totalorder %s252, %s253
      %p264 = scmp.eq.s32.totalorder %s30, 0
      %p265 = por %p263, %p264
      %p266 = scmp.ne.s32.totalorder %s252, %s253
      %p267 = scmp.eq.s32.totalorder %s31, 1
      %p268 = por %p266, %p267
      %p270 = scmp.ne.s32.totalorder %s253, %s269
      %p271 = scmp.eq.s32.totalorder %s31, 0
      %p272 = por %p270, %p271
      %p273 = scmp.le.s32.totalorder 1, %s25
      %p274 = scmp.lt.s32.totalorder %s25, 3
      %p275 = pnand %p273, %p274
      %p276 = pneg %p275
      // Predicated region
      $region9: #{pos_encoding_forward.2} parent=5 // pred_check
        _
      $region10: #{pos_encoding_forward.2} parent=5 // pred_check_branch
        %278 = sbr.rel (%p275) target = $region12
      $region11: #{pos_encoding_forward.2} parent=5 // pred_region
        %s279 = ssub.s32 %s25, 1
        // Predicated region
        $region13: #{pos_encoding_forward.2} parent=11 // pred_check
          %p280 = pneg %p63
        $region14: #{pos_encoding_forward.2} parent=11 // pred_check_branch
          %282 = sbr.rel (%p280) target = $region16
        $region15: #{pos_encoding_forward.2} parent=11 // pred_region
          %p283 = scmp.lt.s32.totalorder %s35, 0
          %s284 = scalar_select %p283, %s35, 0
          %s285 = smul.addr %s284, 8
          %s286 = scalar_lea.vmem %s0, %s285
        $region16: #{pos_encoding_forward.2} parent=11 // pred_fallthru
          _
        // Predicated region
        $region17: #{pos_encoding_forward.2} parent=11 // pred_check
          %p287 = pneg %p89
        $region18: #{pos_encoding_forward.2} parent=11 // pred_check_branch
          %289 = sbr.rel (%p287) target = $region20
        $region19: #{pos_encoding_forward.2} parent=11 // pred_region
          %p290 = scmp.lt.s32.totalorder %s35, 0
          %s291 = scalar_select %p290, %s35, 0
          %s292 = smul.addr %s291, 8
          %s293 = scalar_lea.vmem %s1, %s292
        $region20: #{pos_encoding_forward.2} parent=11 // pred_fallthru
          _
      $region12: #{pos_encoding_forward.2} parent=5 // pred_fallthru
        _
      %p294 = scmp.lt.s32.totalorder %s25, 2
      // Predicated region
      $region21: #{pos_encoding_forward.2} parent=5 // pred_check
        %p295 = pneg %p294
      $region22: #{pos_encoding_forward.2} parent=5 // pred_check_branch
        %297 = sbr.rel (%p295) target = $region24
      $region23: #{pos_encoding_forward.2} parent=5 // pred_region
        // Predicated region
        $region25: #{pos_encoding_forward.2} parent=23 // pred_check
          %p298 = pneg %p115
        $region26: #{pos_encoding_forward.2} parent=23 // pred_check_branch
          %300 = sbr.rel (%p298) target = $region28
        $region27: #{pos_encoding_forward.2} parent=23 // pred_region
          %s302 = smul.u32 8, %s33
          %s303 = ssub.s32 1, 0
          %s304 = smul.u32 512, %s303
          %p305 = scmp.lt.s32.totalorder %s32, 1
          %s306 = scalar_select %p305, %s32, 1
          %p307 = scmp.lt.s32.totalorder %s302, 7
          %s308 = scalar_select %p307, %s302, 7
          %p309 = scmp.lt.s32.totalorder 0, 0
          %s310 = scalar_select %p309, 0, 0
          %s311 = sadd.s32 %s310, %s308
          %s312 = smul.addr %s306, 8
          %s313 = sadd.s32 %s311, %s312
          %s314 = smul.addr %s313, 4
          %s315 = scalar_lea.vmem %s2, %s314
          %s317 = smul.u32 8, %s33
          %s318 = ssub.s32 1, 0
          %s319 = smul.u32 512, %s318
        $region28: #{pos_encoding_forward.2} parent=23 // pred_fallthru
          _
        // Predicated region
        $region29: #{pos_encoding_forward.2} parent=23 // pred_check
          %p320 = pneg %p143
        $region30: #{pos_encoding_forward.2} parent=23 // pred_check_branch
          %322 = sbr.rel (%p320) target = $region32
        $region31: #{pos_encoding_forward.2} parent=23 // pred_region
          %s323 = smul.u32 8, %s33
          %p324 = scmp.lt.s32.totalorder %s32, 1
          %s325 = scalar_select %p324, %s32, 1
          %p326 = scmp.lt.s32.totalorder %s323, 7
          %s327 = scalar_select %p326, %s323, 7
          %s328 = smul.addr %s325, 8
          %s329 = sadd.s32 %s327, %s328
          %s330 = smul.addr %s329, 4
          %s331 = scalar_lea.vmem %s4, %s330
          %s332 = smul.u32 8, %s33
        $region32: #{pos_encoding_forward.2} parent=23 // pred_fallthru
          _
        // Predicated region
        $region33: #{pos_encoding_forward.2} parent=23 // pred_check
          %p333 = pneg %p175
        $region34: #{pos_encoding_forward.2} parent=23 // pred_check_branch
          %335 = sbr.rel (%p333) target = $region36
        $region35: #{pos_encoding_forward.2} parent=23 // pred_region
          %s337 = smul.u32 8, %s33
          %s338 = ssub.s32 1, 0
          %s339 = smul.u32 512, %s338
          %p340 = scmp.lt.s32.totalorder %s32, 1
          %s341 = scalar_select %p340, %s32, 1
          %p342 = scmp.lt.s32.totalorder %s337, 7
          %s343 = scalar_select %p342, %s337, 7
          %p344 = scmp.lt.s32.totalorder 0, 0
          %s345 = scalar_select %p344, 0, 0
          %s346 = sadd.s32 %s345, %s343
          %s347 = smul.addr %s341, 8
          %s348 = sadd.s32 %s346, %s347
          %s349 = smul.addr %s348, 4
          %s350 = scalar_lea.vmem %s5, %s349
          %s352 = smul.u32 8, %s33
          %s353 = ssub.s32 1, 0
          %s354 = smul.u32 512, %s353
        $region36: #{pos_encoding_forward.2} parent=23 // pred_fallthru
          _
        // Predicated region
        $region37: #{pos_encoding_forward.2} parent=23 // pred_check
          %p355 = pneg %p203
        $region38: #{pos_encoding_forward.2} parent=23 // pred_check_branch
          %357 = sbr.rel (%p355) target = $region40
        $region39: #{pos_encoding_forward.2} parent=23 // pred_region
          %s358 = smul.u32 8, %s33
          %p359 = scmp.lt.s32.totalorder %s32, 1
          %s360 = scalar_select %p359, %s32, 1
          %p361 = scmp.lt.s32.totalorder %s358, 7
          %s362 = scalar_select %p361, %s358, 7
          %s363 = smul.addr %s360, 8
          %s364 = sadd.s32 %s362, %s363
          %s365 = smul.addr %s364, 4
          %s366 = scalar_lea.vmem %s6, %s365
          %s367 = smul.u32 8, %s33
        $region40: #{pos_encoding_forward.2} parent=23 // pred_fallthru
          _
      $region24: #{pos_encoding_forward.2} parent=5 // pred_fallthru
        _
      %p368 = scmp.le.s32.totalorder 1, %s25
      %p369 = scmp.lt.s32.totalorder %s25, 3
      %p370 = pnand %p368, %p369
      %p371 = pneg %p370
      // Predicated region
      $region41: #{pos_encoding_forward.2} parent=5 // pred_check
        _
      $region42: #{pos_encoding_forward.2} parent=5 // pred_check_branch
        %373 = sbr.rel (%p370) target = $region44
      $region43: #{pos_encoding_forward.2} parent=5 // pred_region
        #allocation26 [shape = 'u8[16384]{0}', space=vmem, size = 0x4000, dematerialized = true, scoped, tag = 'FusionAdapter Buffer %fusion.1 = f32[2,8,4,32]{3,2,1,0:T(4,128)} fusion(%param_2.4, %param_3.3, %param_4.3), kind=kLoop, calls=%fused_computation.1.clone, metadata={op_name="jit(pos_encoding_forward)/concatenate" stack_frame_id=10}']
        #allocation27 [shape = 'u8[16384]{0}', space=vmem, size = 0x4000, dematerialized = true, scoped, tag = 'FusionAdapter Buffer %fusion.4 = f32[2,8,4,32]{3,2,1,0:T(4,128)} fusion(%param_5.3, %param_3.3, %param_6.2), kind=kLoop, calls=%fused_computation.4.clone, metadata={op_name="jit(pos_encoding_forward)/concatenate" stack_frame_id=13}']
        %s374 = ssub.s32 %s25, 1
        %p375 = scmp.lt.s32.totalorder %s35, 0
        %s376 = scalar_select %p375, %s35, 0
        %s377 = smul.addr %s376, 8
        %s378 = scalar_lea.vmem %s0, %s377
        %p379 = pneg %p63
        %p380 = pneg %p60
        %p381 = scmp.lt.s32.totalorder %s35, 0
        %s382 = scalar_select %p381, %s35, 0
        %s383 = smul.addr %s382, 8
        %s384 = scalar_lea.vmem %s1, %s383
        %p385 = pneg %p89
        %p386 = pneg %p86
        %s388 = smul.u32 8, %s35
        %s389 = ssub.s32 1, 0
        %s390 = smul.u32 512, %s389
        %p391 = scmp.lt.s32.totalorder %s34, 1
        %s392 = scalar_select %p391, %s34, 1
        %p393 = scmp.lt.s32.totalorder %s388, 7
        %s394 = scalar_select %p393, %s388, 7
        %p395 = scmp.lt.s32.totalorder 0, 0
        %s396 = scalar_select %p395, 0, 0
        %s397 = sadd.s32 %s396, %s394
        %s398 = smul.addr %s392, 8
        %s399 = sadd.s32 %s397, %s398
        %s400 = smul.addr %s399, 4
        %s401 = scalar_lea.vmem %s2, %s400
        %p402 = pneg %p121
        %p403 = pneg %p118
        %s404 = smul.u32 8, %s35
        %p405 = scmp.lt.s32.totalorder %s34, 1
        %s406 = scalar_select %p405, %s34, 1
        %p407 = scmp.lt.s32.totalorder %s404, 7
        %s408 = scalar_select %p407, %s404, 7
        %s409 = smul.addr %s406, 8
        %s410 = sadd.s32 %s408, %s409
        %s411 = smul.addr %s410, 4
        %s412 = scalar_lea.vmem %s4, %s411
        %p413 = pneg %p149
        %p414 = pneg %p146
        %s416 = smul.u32 8, %s35
        %s417 = ssub.s32 1, 0
        %s418 = smul.u32 512, %s417
        %p419 = scmp.lt.s32.totalorder %s34, 1
        %s420 = scalar_select %p419, %s34, 1
        %p421 = scmp.lt.s32.totalorder %s416, 7
        %s422 = scalar_select %p421, %s416, 7
        %p423 = scmp.lt.s32.totalorder 0, 0
        %s424 = scalar_select %p423, 0, 0
        %s425 = sadd.s32 %s424, %s422
        %s426 = smul.addr %s420, 8
        %s427 = sadd.s32 %s425, %s426
        %s428 = smul.addr %s427, 4
        %s429 = scalar_lea.vmem %s5, %s428
        %p430 = pneg %p181
        %p431 = pneg %p178
        %s432 = smul.u32 8, %s35
        %p433 = scmp.lt.s32.totalorder %s34, 1
        %s434 = scalar_select %p433, %s34, 1
        %p435 = scmp.lt.s32.totalorder %s432, 7
        %s436 = scalar_select %p435, %s432, 7
        %s437 = smul.addr %s434, 8
        %s438 = sadd.s32 %s436, %s437
        %s439 = smul.addr %s438, 4
        %s440 = scalar_lea.vmem %s6, %s439
        %p441 = pneg %p209
        %p442 = pneg %p206
        %p443 = pneg %p237
        %p444 = pneg %p234
        %s445 = sand.u32 %s224, 1
        %s446 = scalar_lea.sflag [#allocation23], %s445
        %s447 = sand.u32 %s224, 1
        %s448 = smul.addr %s447, 32
        %s449 = scalar_lea.vmem [#allocation22], %s448
        %p450 = pneg %p265
        %p451 = pneg %p262
        %s452 = sand.u32 %s252, 1
        %s453 = scalar_lea.sflag [#allocation25], %s452
        %s454 = sand.u32 %s252, 1
        %s455 = smul.addr %s454, 32
        %s456 = scalar_lea.vmem [#allocation24], %s455
        %p457 = scmp.lt.s32.totalorder %s35, 0
        %s458 = scalar_select %p457, %s35, 0
        %s459 = smul.addr %s458, 8
        %s460 = scalar_lea.vmem %s0, %s459
        %p461 = scmp.lt.s32.totalorder %s35, 0
        %s462 = scalar_select %p461, %s35, 0
        %s463 = smul.addr %s462, 8
        %s464 = scalar_lea.vmem %s1, %s463
        %s466 = smul.u32 8, %s35
        %s467 = ssub.s32 1, 0
        %s468 = smul.u32 512, %s467
        %p469 = scmp.lt.s32.totalorder %s34, 1
        %s470 = scalar_select %p469, %s34, 1
        %p471 = scmp.lt.s32.totalorder %s466, 7
        %s472 = scalar_select %p471, %s466, 7
        %p473 = scmp.lt.s32.totalorder 0, 0
        %s474 = scalar_select %p473, 0, 0
        %s475 = sadd.s32 %s474, %s472
        %s476 = smul.addr %s470, 8
        %s477 = sadd.s32 %s475, %s476
        %s478 = smul.addr %s477, 4
        %s479 = scalar_lea.vmem %s2, %s478
        %s481 = smul.u32 8, %s35
        %s482 = ssub.s32 1, 0
        %s483 = smul.u32 512, %s482
        %s484 = smul.u32 8, %s35
        %p485 = scmp.lt.s32.totalorder %s34, 1
        %s486 = scalar_select %p485, %s34, 1
        %p487 = scmp.lt.s32.totalorder %s484, 7
        %s488 = scalar_select %p487, %s484, 7
        %s489 = smul.addr %s486, 8
        %s490 = sadd.s32 %s488, %s489
        %s491 = smul.addr %s490, 4
        %s492 = scalar_lea.vmem %s4, %s491
        %s493 = smul.u32 8, %s35
        %s495 = smul.u32 8, %s35
        %s496 = ssub.s32 1, 0
        %s497 = smul.u32 512, %s496
        %p498 = scmp.lt.s32.totalorder %s34, 1
        %s499 = scalar_select %p498, %s34, 1
        %p500 = scmp.lt.s32.totalorder %s495, 7
        %s501 = scalar_select %p500, %s495, 7
        %p502 = scmp.lt.s32.totalorder 0, 0
        %s503 = scalar_select %p502, 0, 0
        %s504 = sadd.s32 %s503, %s501
        %s505 = smul.addr %s499, 8
        %s506 = sadd.s32 %s504, %s505
        %s507 = smul.addr %s506, 4
        %s508 = scalar_lea.vmem %s5, %s507
        %s510 = smul.u32 8, %s35
        %s511 = ssub.s32 1, 0
        %s512 = smul.u32 512, %s511
        %s513 = smul.u32 8, %s35
        %p514 = scmp.lt.s32.totalorder %s34, 1
        %s515 = scalar_select %p514, %s34, 1
        %p516 = scmp.lt.s32.totalorder %s513, 7
        %s517 = scalar_select %p516, %s513, 7
        %s518 = smul.addr %s515, 8
        %s519 = sadd.s32 %s517, %s518
        %s520 = smul.addr %s519, 4
        %s521 = scalar_lea.vmem %s6, %s520
        %s522 = smul.u32 8, %s35
        %s523 = smul.u32 8, %s35
        %s524 = smul.u32 8, %s35
        %s525 = ssub.s32 0, 0
        %p526 = scmp.lt.s32.totalorder %s525, 0
        %s527 = scalar_select %p526, 0, 255
        %s528 = sand.u32 15, %s527
        %s529 = sand.u32 15, %s528
        %v530 = vld [vmem:[%s479] sm:%s529]
        %s531 = smul.u32 8, %s35
        %v532 = vlaneseq
        %v533 = vshrl.u32 %v532, 7
        %vm535 = vcmp.lt.s32.totalorder %v533, 4
        %v536 = vsel %vm535, %v530, %v14
        %v537 = vlaneseq
        %v538 = vand.u32 %v537, 127
        %v539 = vadd.s32 %v538, 128
        %vm540 = vcmp.lt.s32.totalorder %v539, 144
        %v541 = vsel %vm540, %v536, %v14
        %v542 = vlaneseq
        %v543 = vand.u32 %v542, 127
        %vm544 = vcmp.lt.s32.totalorder %v543, 112
        %v545 = vsel %vm544, %v541, %v14
        %546 = vrot.lane.b32.xlu0 %v545, 16
        %v547 = vpop.permute.xlu0 %546
        %v548 = vld [vmem:[%s492] sm:$0xf]
        %v549 = vlaneseq
        %v550 = vshrl.u32 %v549, 7
        %vm552 = vcmp.lt.s32.totalorder %v550, 4
        %v553 = vsel %vm552, %v548, %v15
        %v554 = vlaneseq
        %v555 = vand.u32 %v554, 127
        %vm557 = vcmp.lt.s32.totalorder %v555, 16
        %v558 = vsel %vm557, %v553, %v15
        %559 = xla_tuple %v558, %v547
        %560 = xla_tuple %559
        %v561 = vmax.f32 %v558, %v547
        %562 = xla_tuple %v561
        %s564 = ssub.s32 16, 1
        %565 = vst [vmem:[#allocation26] sm:%s564] %v561
        %s566 = scalar_lea.vmem %s479, 4
        %s567 = ssub.s32 0, 0
        %p568 = scmp.lt.s32.totalorder %s567, 0
        %s569 = scalar_select %p568, 0, 255
        %s570 = sand.u32 15, %s569
        %s571 = sand.u32 15, %s570
        %v572 = vld [vmem:[%s566] sm:%s571]
        %s573 = scalar_lea.vmem %s479, 4
        %v574 = vlaneseq
        %v575 = vshrl.u32 %v574, 7
        %vm577 = vcmp.lt.s32.totalorder %v575, 4
        %v578 = vsel %vm577, %v572, %v14
        %v579 = vlaneseq
        %v580 = vand.u32 %v579, 127
        %v581 = vadd.s32 %v580, 128
        %vm582 = vcmp.lt.s32.totalorder %v581, 144
        %v583 = vsel %vm582, %v578, %v14
        %v584 = vlaneseq
        %v585 = vand.u32 %v584, 127
        %vm586 = vcmp.lt.s32.totalorder %v585, 112
        %v587 = vsel %vm586, %v583, %v14
        %588 = vrot.lane.b32.xlu0 %v587, 16
        %v589 = vpop.permute.xlu0 %588
        %s590 = scalar_lea.vmem %s492, 4
        %v591 = vld [vmem:[%s590] sm:$0xf]
        %v592 = vlaneseq
        %v593 = vshrl.u32 %v592, 7
        %vm595 = vcmp.lt.s32.totalorder %v593, 4
        %v596 = vsel %vm595, %v591, %v15
        %v597 = vlaneseq
        %v598 = vand.u32 %v597, 127
        %vm600 = vcmp.lt.s32.totalorder %v598, 16
        %v601 = vsel %vm600, %v596, %v15
        %602 = xla_tuple %v601, %v589
        %603 = xla_tuple %602
        %v604 = vmax.f32 %v601, %v589
        %605 = xla_tuple %v604
        %s606 = scalar_lea.vmem [#allocation26], 4
        %s608 = ssub.s32 16, 1
        %609 = vst [vmem:[%s606] sm:%s608] %v604
        %s610 = scalar_lea.vmem %s479, 8
        %s611 = ssub.s32 0, 0
        %p612 = scmp.lt.s32.totalorder %s611, 0
        %s613 = scalar_select %p612, 0, 255
        %s614 = sand.u32 15, %s613
        %s615 = sand.u32 15, %s614
        %v616 = vld [vmem:[%s610] sm:%s615]
        %s617 = scalar_lea.vmem %s479, 8
        %v618 = vlaneseq
        %v619 = vshrl.u32 %v618, 7
        %vm621 = vcmp.lt.s32.totalorder %v619, 4
        %v622 = vsel %vm621, %v616, %v14
        %v623 = vlaneseq
        %v624 = vand.u32 %v623, 127
        %v625 = vadd.s32 %v624, 128
        %vm626 = vcmp.lt.s32.totalorder %v625, 144
        %v627 = vsel %vm626, %v622, %v14
        %v628 = vlaneseq
        %v629 = vand.u32 %v628, 127
        %vm630 = vcmp.lt.s32.totalorder %v629, 112
        %v631 = vsel %vm630, %v627, %v14
        %632 = vrot.lane.b32.xlu0 %v631, 16
        %v633 = vpop.permute.xlu0 %632
        %s634 = scalar_lea.vmem %s492, 8
        %v635 = vld [vmem:[%s634] sm:$0xf]
        %v636 = vlaneseq
        %v637 = vshrl.u32 %v636, 7
        %vm639 = vcmp.lt.s32.totalorder %v637, 4
        %v640 = vsel %vm639, %v635, %v15
        %v641 = vlaneseq
        %v642 = vand.u32 %v641, 127
        %vm644 = vcmp.lt.s32.totalorder %v642, 16
        %v645 = vsel %vm644, %v640, %v15
        %646 = xla_tuple %v645, %v633
        %647 = xla_tuple %646
        %v648 = vmax.f32 %v645, %v633
        %649 = xla_tuple %v648
        %s650 = scalar_lea.vmem [#allocation26], 8
        %s652 = ssub.s32 16, 1
        %653 = vst [vmem:[%s650] sm:%s652] %v648
        %s654 = scalar_lea.vmem %s479, 12
        %s655 = ssub.s32 0, 0
        %p656 = scmp.lt.s32.totalorder %s655, 0
        %s657 = scalar_select %p656, 0, 255
        %s658 = sand.u32 15, %s657
        %s659 = sand.u32 15, %s658
        %v660 = vld [vmem:[%s654] sm:%s659]
        %s661 = scalar_lea.vmem %s479, 12
        %v662 = vlaneseq
        %v663 = vshrl.u32 %v662, 7
        %vm665 = vcmp.lt.s32.totalorder %v663, 4
        %v666 = vsel %vm665, %v660, %v14
        %v667 = vlaneseq
        %v668 = vand.u32 %v667, 127
        %v669 = vadd.s32 %v668, 128
        %vm670 = vcmp.lt.s32.totalorder %v669, 144
        %v671 = vsel %vm670, %v666, %v14
        %v672 = vlaneseq
        %v673 = vand.u32 %v672, 127
        %vm674 = vcmp.lt.s32.totalorder %v673, 112
        %v675 = vsel %vm674, %v671, %v14
        %676 = vrot.lane.b32.xlu0 %v675, 16
        %v677 = vpop.permute.xlu0 %676
        %s678 = scalar_lea.vmem %s492, 12
        %v679 = vld [vmem:[%s678] sm:$0xf]
        %v680 = vlaneseq
        %v681 = vshrl.u32 %v680, 7
        %vm683 = vcmp.lt.s32.totalorder %v681, 4
        %v684 = vsel %vm683, %v679, %v15
        %v685 = vlaneseq
        %v686 = vand.u32 %v685, 127
        %vm688 = vcmp.lt.s32.totalorder %v686, 16
        %v689 = vsel %vm688, %v684, %v15
        %690 = xla_tuple %v689, %v677
        %691 = xla_tuple %690
        %v692 = vmax.f32 %v689, %v677
        %693 = xla_tuple %v692
        %s694 = scalar_lea.vmem [#allocation26], 12
        %s696 = ssub.s32 16, 1
        %697 = vst [vmem:[%s694] sm:%s696] %v692
        %s698 = scalar_lea.vmem %s479, 16
        %s699 = ssub.s32 0, 0
        %p700 = scmp.lt.s32.totalorder %s699, 0
        %s701 = scalar_select %p700, 0, 255
        %s702 = sand.u32 15, %s701
        %s703 = sand.u32 15, %s702
        %v704 = vld [vmem:[%s698] sm:%s703]
        %s705 = scalar_lea.vmem %s479, 16
        %v706 = vlaneseq
        %v707 = vshrl.u32 %v706, 7
        %vm709 = vcmp.lt.s32.totalorder %v707, 4
        %v710 = vsel %vm709, %v704, %v14
        %v711 = vlaneseq
        %v712 = vand.u32 %v711, 127
        %v713 = vadd.s32 %v712, 128
        %vm714 = vcmp.lt.s32.totalorder %v713, 144
        %v715 = vsel %vm714, %v710, %v14
        %v716 = vlaneseq
        %v717 = vand.u32 %v716, 127
        %vm718 = vcmp.lt.s32.totalorder %v717, 112
        %v719 = vsel %vm718, %v715, %v14
        %720 = vrot.lane.b32.xlu0 %v719, 16
        %v721 = vpop.permute.xlu0 %720
        %s722 = scalar_lea.vmem %s492, 16
        %v723 = vld [vmem:[%s722] sm:$0xf]
        %v724 = vlaneseq
        %v725 = vshrl.u32 %v724, 7
        %vm727 = vcmp.lt.s32.totalorder %v725, 4
        %v728 = vsel %vm727, %v723, %v15
        %v729 = vlaneseq
        %v730 = vand.u32 %v729, 127
        %vm732 = vcmp.lt.s32.totalorder %v730, 16
        %v733 = vsel %vm732, %v728, %v15
        %734 = xla_tuple %v733, %v721
        %735 = xla_tuple %734
        %v736 = vmax.f32 %v733, %v721
        %737 = xla_tuple %v736
        %s738 = scalar_lea.vmem [#allocation26], 16
        %s740 = ssub.s32 16, 1
        %741 = vst [vmem:[%s738] sm:%s740] %v736
        %s742 = scalar_lea.vmem %s479, 20
        %s743 = ssub.s32 0, 0
        %p744 = scmp.lt.s32.totalorder %s743, 0
        %s745 = scalar_select %p744, 0, 255
        %s746 = sand.u32 15, %s745
        %s747 = sand.u32 15, %s746
        %v748 = vld [vmem:[%s742] sm:%s747]
        %s749 = scalar_lea.vmem %s479, 20
        %v750 = vlaneseq
        %v751 = vshrl.u32 %v750, 7
        %vm753 = vcmp.lt.s32.totalorder %v751, 4
        %v754 = vsel %vm753, %v748, %v14
        %v755 = vlaneseq
        %v756 = vand.u32 %v755, 127
        %v757 = vadd.s32 %v756, 128
        %vm758 = vcmp.lt.s32.totalorder %v757, 144
        %v759 = vsel %vm758, %v754, %v14
        %v760 = vlaneseq
        %v761 = vand.u32 %v760, 127
        %vm762 = vcmp.lt.s32.totalorder %v761, 112
        %v763 = vsel %vm762, %v759, %v14
        %764 = vrot.lane.b32.xlu0 %v763, 16
        %v765 = vpop.permute.xlu0 %764
        %s766 = scalar_lea.vmem %s492, 20
        %v767 = vld [vmem:[%s766] sm:$0xf]
        %v768 = vlaneseq
        %v769 = vshrl.u32 %v768, 7
        %vm771 = vcmp.lt.s32.totalorder %v769, 4
        %v772 = vsel %vm771, %v767, %v15
        %v773 = vlaneseq
        %v774 = vand.u32 %v773, 127
        %vm776 = vcmp.lt.s32.totalorder %v774, 16
        %v777 = vsel %vm776, %v772, %v15
        %778 = xla_tuple %v777, %v765
        %779 = xla_tuple %778
        %v780 = vmax.f32 %v777, %v765
        %781 = xla_tuple %v780
        %s782 = scalar_lea.vmem [#allocation26], 20
        %s784 = ssub.s32 16, 1
        %785 = vst [vmem:[%s782] sm:%s784] %v780
        %s786 = scalar_lea.vmem %s479, 24
        %s787 = ssub.s32 0, 0
        %p788 = scmp.lt.s32.totalorder %s787, 0
        %s789 = scalar_select %p788, 0, 255
        %s790 = sand.u32 15, %s789
        %s791 = sand.u32 15, %s790
        %v792 = vld [vmem:[%s786] sm:%s791]
        %s793 = scalar_lea.vmem %s479, 24
        %v794 = vlaneseq
        %v795 = vshrl.u32 %v794, 7
        %vm797 = vcmp.lt.s32.totalorder %v795, 4
        %v798 = vsel %vm797, %v792, %v14
        %v799 = vlaneseq
        %v800 = vand.u32 %v799, 127
        %v801 = vadd.s32 %v800, 128
        %vm802 = vcmp.lt.s32.totalorder %v801, 144
        %v803 = vsel %vm802, %v798, %v14
        %v804 = vlaneseq
        %v805 = vand.u32 %v804, 127
        %vm806 = vcmp.lt.s32.totalorder %v805, 112
        %v807 = vsel %vm806, %v803, %v14
        %808 = vrot.lane.b32.xlu0 %v807, 16
        %v809 = vpop.permute.xlu0 %808
        %s810 = scalar_lea.vmem %s492, 24
        %v811 = vld [vmem:[%s810] sm:$0xf]
        %v812 = vlaneseq
        %v813 = vshrl.u32 %v812, 7
        %vm815 = vcmp.lt.s32.totalorder %v813, 4
        %v816 = vsel %vm815, %v811, %v15
        %v817 = vlaneseq
        %v818 = vand.u32 %v817, 127
        %vm820 = vcmp.lt.s32.totalorder %v818, 16
        %v821 = vsel %vm820, %v816, %v15
        %822 = xla_tuple %v821, %v809
        %823 = xla_tuple %822
        %v824 = vmax.f32 %v821, %v809
        %825 = xla_tuple %v824
        %s826 = scalar_lea.vmem [#allocation26], 24
        %s828 = ssub.s32 16, 1
        %829 = vst [vmem:[%s826] sm:%s828] %v824
        %s830 = scalar_lea.vmem %s479, 28
        %s831 = ssub.s32 0, 0
        %p832 = scmp.lt.s32.totalorder %s831, 0
        %s833 = scalar_select %p832, 0, 255
        %s834 = sand.u32 15, %s833
        %s835 = sand.u32 15, %s834
        %v836 = vld [vmem:[%s830] sm:%s835]
        %s837 = scalar_lea.vmem %s479, 28
        %v838 = vlaneseq
        %v839 = vshrl.u32 %v838, 7
        %vm841 = vcmp.lt.s32.totalorder %v839, 4
        %v842 = vsel %vm841, %v836, %v14
        %v843 = vlaneseq
        %v844 = vand.u32 %v843, 127
        %v845 = vadd.s32 %v844, 128
        %vm846 = vcmp.lt.s32.totalorder %v845, 144
        %v847 = vsel %vm846, %v842, %v14
        %v848 = vlaneseq
        %v849 = vand.u32 %v848, 127
        %vm850 = vcmp.lt.s32.totalorder %v849, 112
        %v851 = vsel %vm850, %v847, %v14
        %852 = vrot.lane.b32.xlu0 %v851, 16
        %v853 = vpop.permute.xlu0 %852
        %s854 = scalar_lea.vmem %s492, 28
        %v855 = vld [vmem:[%s854] sm:$0xf]
        %v856 = vlaneseq
        %v857 = vshrl.u32 %v856, 7
        %vm859 = vcmp.lt.s32.totalorder %v857, 4
        %v860 = vsel %vm859, %v855, %v15
        %v861 = vlaneseq
        %v862 = vand.u32 %v861, 127
        %vm864 = vcmp.lt.s32.totalorder %v862, 16
        %v865 = vsel %vm864, %v860, %v15
        %866 = xla_tuple %v865, %v853
        %867 = xla_tuple %866
        %v868 = vmax.f32 %v865, %v853
        %869 = xla_tuple %v868
        %s870 = scalar_lea.vmem [#allocation26], 28
        %s872 = ssub.s32 16, 1
        %873 = vst [vmem:[%s870] sm:%s872] %v868
        %s874 = ssub.s32 0, 0
        %p875 = scmp.lt.s32.totalorder %s874, 0
        %s876 = scalar_select %p875, 0, 255
        %s877 = sand.u32 15, %s876
        %s878 = sand.u32 15, %s877
        %v879 = vld [vmem:[%s508] sm:%s878]
        %s880 = smul.u32 8, %s35
        %v881 = vlaneseq
        %v882 = vshrl.u32 %v881, 7
        %vm884 = vcmp.lt.s32.totalorder %v882, 4
        %v885 = vsel %vm884, %v879, %v16
        %v886 = vlaneseq
        %v887 = vand.u32 %v886, 127
        %v888 = vadd.s32 %v887, 128
        %vm889 = vcmp.lt.s32.totalorder %v888, 144
        %v890 = vsel %vm889, %v885, %v16
        %v891 = vlaneseq
        %v892 = vand.u32 %v891, 127
        %vm893 = vcmp.lt.s32.totalorder %v892, 112
        %v894 = vsel %vm893, %v890, %v16
        %895 = vrot.lane.b32.xlu0 %v894, 16
        %v896 = vpop.permute.xlu0 %895
        %v897 = vld [vmem:[%s521] sm:$0xf]
        %v898 = vlaneseq
        %v899 = vshrl.u32 %v898, 7
        %vm901 = vcmp.lt.s32.totalorder %v899, 4
        %v902 = vsel %vm901, %v897, %v17
        %v903 = vlaneseq
        %v904 = vand.u32 %v903, 127
        %vm906 = vcmp.lt.s32.totalorder %v904, 16
        %v907 = vsel %vm906, %v902, %v17
        %908 = xla_tuple %v907, %v896
        %909 = xla_tuple %908
        %v910 = vmax.f32 %v907, %v896
        %911 = xla_tuple %v910
        %s913 = ssub.s32 16, 1
        %914 = vst [vmem:[#allocation27] sm:%s913] %v910
        %s915 = scalar_lea.vmem %s508, 4
        %s916 = ssub.s32 0, 0
        %p917 = scmp.lt.s32.totalorder %s916, 0
        %s918 = scalar_select %p917, 0, 255
        %s919 = sand.u32 15, %s918
        %s920 = sand.u32 15, %s919
        %v921 = vld [vmem:[%s915] sm:%s920]
        %s922 = scalar_lea.vmem %s508, 4
        %v923 = vlaneseq
        %v924 = vshrl.u32 %v923, 7
        %vm926 = vcmp.lt.s32.totalorder %v924, 4
        %v927 = vsel %vm926, %v921, %v16
        %v928 = vlaneseq
        %v929 = vand.u32 %v928, 127
        %v930 = vadd.s32 %v929, 128
        %vm931 = vcmp.lt.s32.totalorder %v930, 144
        %v932 = vsel %vm931, %v927, %v16
        %v933 = vlaneseq
        %v934 = vand.u32 %v933, 127
        %vm935 = vcmp.lt.s32.totalorder %v934, 112
        %v936 = vsel %vm935, %v932, %v16
        %937 = vrot.lane.b32.xlu0 %v936, 16
        %v938 = vpop.permute.xlu0 %937
        %s939 = scalar_lea.vmem %s521, 4
        %v940 = vld [vmem:[%s939] sm:$0xf]
        %v941 = vlaneseq
        %v942 = vshrl.u32 %v941, 7
        %vm944 = vcmp.lt.s32.totalorder %v942, 4
        %v945 = vsel %vm944, %v940, %v17
        %v946 = vlaneseq
        %v947 = vand.u32 %v946, 127
        %vm949 = vcmp.lt.s32.totalorder %v947, 16
        %v950 = vsel %vm949, %v945, %v17
        %951 = xla_tuple %v950, %v938
        %952 = xla_tuple %951
        %v953 = vmax.f32 %v950, %v938
        %954 = xla_tuple %v953
        %s955 = scalar_lea.vmem [#allocation27], 4
        %s957 = ssub.s32 16, 1
        %958 = vst [vmem:[%s955] sm:%s957] %v953
        %s959 = scalar_lea.vmem %s508, 8
        %s960 = ssub.s32 0, 0
        %p961 = scmp.lt.s32.totalorder %s960, 0
        %s962 = scalar_select %p961, 0, 255
        %s963 = sand.u32 15, %s962
        %s964 = sand.u32 15, %s963
        %v965 = vld [vmem:[%s959] sm:%s964]
        %s966 = scalar_lea.vmem %s508, 8
        %v967 = vlaneseq
        %v968 = vshrl.u32 %v967, 7
        %vm970 = vcmp.lt.s32.totalorder %v968, 4
        %v971 = vsel %vm970, %v965, %v16
        %v972 = vlaneseq
        %v973 = vand.u32 %v972, 127
        %v974 = vadd.s32 %v973, 128
        %vm975 = vcmp.lt.s32.totalorder %v974, 144
        %v976 = vsel %vm975, %v971, %v16
        %v977 = vlaneseq
        %v978 = vand.u32 %v977, 127
        %vm979 = vcmp.lt.s32.totalorder %v978, 112
        %v980 = vsel %vm979, %v976, %v16
        %981 = vrot.lane.b32.xlu0 %v980, 16
        %v982 = vpop.permute.xlu0 %981
        %s983 = scalar_lea.vmem %s521, 8
        %v984 = vld [vmem:[%s983] sm:$0xf]
        %v985 = vlaneseq
        %v986 = vshrl.u32 %v985, 7
        %vm988 = vcmp.lt.s32.totalorder %v986, 4
        %v989 = vsel %vm988, %v984, %v17
        %v990 = vlaneseq
        %v991 = vand.u32 %v990, 127
        %vm993 = vcmp.lt.s32.totalorder %v991, 16
        %v994 = vsel %vm993, %v989, %v17
        %995 = xla_tuple %v994, %v982
        %996 = xla_tuple %995
        %v997 = vmax.f32 %v994, %v982
        %998 = xla_tuple %v997
        %s999 = scalar_lea.vmem [#allocation27], 8
        %s1001 = ssub.s32 16, 1
        %1002 = vst [vmem:[%s999] sm:%s1001] %v997
        %s1003 = scalar_lea.vmem %s508, 12
        %s1004 = ssub.s32 0, 0
        %p1005 = scmp.lt.s32.totalorder %s1004, 0
        %s1006 = scalar_select %p1005, 0, 255
        %s1007 = sand.u32 15, %s1006
        %s1008 = sand.u32 15, %s1007
        %v1009 = vld [vmem:[%s1003] sm:%s1008]
        %s1010 = scalar_lea.vmem %s508, 12
        %v1011 = vlaneseq
        %v1012 = vshrl.u32 %v1011, 7
        %vm1014 = vcmp.lt.s32.totalorder %v1012, 4
        %v1015 = vsel %vm1014, %v1009, %v16
        %v1016 = vlaneseq
        %v1017 = vand.u32 %v1016, 127
        %v1018 = vadd.s32 %v1017, 128
        %vm1019 = vcmp.lt.s32.totalorder %v1018, 144
        %v1020 = vsel %vm1019, %v1015, %v16
        %v1021 = vlaneseq
        %v1022 = vand.u32 %v1021, 127
        %vm1023 = vcmp.lt.s32.totalorder %v1022, 112
        %v1024 = vsel %vm1023, %v1020, %v16
        %1025 = vrot.lane.b32.xlu0 %v1024, 16
        %v1026 = vpop.permute.xlu0 %1025
        %s1027 = scalar_lea.vmem %s521, 12
        %v1028 = vld [vmem:[%s1027] sm:$0xf]
        %v1029 = vlaneseq
        %v1030 = vshrl.u32 %v1029, 7
        %vm1032 = vcmp.lt.s32.totalorder %v1030, 4
        %v1033 = vsel %vm1032, %v1028, %v17
        %v1034 = vlaneseq
        %v1035 = vand.u32 %v1034, 127
        %vm1037 = vcmp.lt.s32.totalorder %v1035, 16
        %v1038 = vsel %vm1037, %v1033, %v17
        %1039 = xla_tuple %v1038, %v1026
        %1040 = xla_tuple %1039
        %v1041 = vmax.f32 %v1038, %v1026
        %1042 = xla_tuple %v1041
        %s1043 = scalar_lea.vmem [#allocation27], 12
        %s1045 = ssub.s32 16, 1
        %1046 = vst [vmem:[%s1043] sm:%s1045] %v1041
        %s1047 = scalar_lea.vmem %s508, 16
        %s1048 = ssub.s32 0, 0
        %p1049 = scmp.lt.s32.totalorder %s1048, 0
        %s1050 = scalar_select %p1049, 0, 255
        %s1051 = sand.u32 15, %s1050
        %s1052 = sand.u32 15, %s1051
        %v1053 = vld [vmem:[%s1047] sm:%s1052]
        %s1054 = scalar_lea.vmem %s508, 16
        %v1055 = vlaneseq
        %v1056 = vshrl.u32 %v1055, 7
        %vm1058 = vcmp.lt.s32.totalorder %v1056, 4
        %v1059 = vsel %vm1058, %v1053, %v16
        %v1060 = vlaneseq
        %v1061 = vand.u32 %v1060, 127
        %v1062 = vadd.s32 %v1061, 128
        %vm1063 = vcmp.lt.s32.totalorder %v1062, 144
        %v1064 = vsel %vm1063, %v1059, %v16
        %v1065 = vlaneseq
        %v1066 = vand.u32 %v1065, 127
        %vm1067 = vcmp.lt.s32.totalorder %v1066, 112
        %v1068 = vsel %vm1067, %v1064, %v16
        %1069 = vrot.lane.b32.xlu0 %v1068, 16
        %v1070 = vpop.permute.xlu0 %1069
        %s1071 = scalar_lea.vmem %s521, 16
        %v1072 = vld [vmem:[%s1071] sm:$0xf]
        %v1073 = vlaneseq
        %v1074 = vshrl.u32 %v1073, 7
        %vm1076 = vcmp.lt.s32.totalorder %v1074, 4
        %v1077 = vsel %vm1076, %v1072, %v17
        %v1078 = vlaneseq
        %v1079 = vand.u32 %v1078, 127
        %vm1081 = vcmp.lt.s32.totalorder %v1079, 16
        %v1082 = vsel %vm1081, %v1077, %v17
        %1083 = xla_tuple %v1082, %v1070
        %1084 = xla_tuple %1083
        %v1085 = vmax.f32 %v1082, %v1070
        %1086 = xla_tuple %v1085
        %s1087 = scalar_lea.vmem [#allocation27], 16
        %s1089 = ssub.s32 16, 1
        %1090 = vst [vmem:[%s1087] sm:%s1089] %v1085
        %s1091 = scalar_lea.vmem %s508, 20
        %s1092 = ssub.s32 0, 0
        %p1093 = scmp.lt.s32.totalorder %s1092, 0
        %s1094 = scalar_select %p1093, 0, 255
        %s1095 = sand.u32 15, %s1094
        %s1096 = sand.u32 15, %s1095
        %v1097 = vld [vmem:[%s1091] sm:%s1096]
        %s1098 = scalar_lea.vmem %s508, 20
        %v1099 = vlaneseq
        %v1100 = vshrl.u32 %v1099, 7
        %vm1102 = vcmp.lt.s32.totalorder %v1100, 4
        %v1103 = vsel %vm1102, %v1097, %v16
        %v1104 = vlaneseq
        %v1105 = vand.u32 %v1104, 127
        %v1106 = vadd.s32 %v1105, 128
        %vm1107 = vcmp.lt.s32.totalorder %v1106, 144
        %v1108 = vsel %vm1107, %v1103, %v16
        %v1109 = vlaneseq
        %v1110 = vand.u32 %v1109, 127
        %vm1111 = vcmp.lt.s32.totalorder %v1110, 112
        %v1112 = vsel %vm1111, %v1108, %v16
        %1113 = vrot.lane.b32.xlu0 %v1112, 16
        %v1114 = vpop.permute.xlu0 %1113
        %s1115 = scalar_lea.vmem %s521, 20
        %v1116 = vld [vmem:[%s1115] sm:$0xf]
        %v1117 = vlaneseq
        %v1118 = vshrl.u32 %v1117, 7
        %vm1120 = vcmp.lt.s32.totalorder %v1118, 4
        %v1121 = vsel %vm1120, %v1116, %v17
        %v1122 = vlaneseq
        %v1123 = vand.u32 %v1122, 127
        %vm1125 = vcmp.lt.s32.totalorder %v1123, 16
        %v1126 = vsel %vm1125, %v1121, %v17
        %1127 = xla_tuple %v1126, %v1114
        %1128 = xla_tuple %1127
        %v1129 = vmax.f32 %v1126, %v1114
        %1130 = xla_tuple %v1129
        %s1131 = scalar_lea.vmem [#allocation27], 20
        %s1133 = ssub.s32 16, 1
        %1134 = vst [vmem:[%s1131] sm:%s1133] %v1129
        %s1135 = scalar_lea.vmem %s508, 24
        %s1136 = ssub.s32 0, 0
        %p1137 = scmp.lt.s32.totalorder %s1136, 0
        %s1138 = scalar_select %p1137, 0, 255
        %s1139 = sand.u32 15, %s1138
        %s1140 = sand.u32 15, %s1139
        %v1141 = vld [vmem:[%s1135] sm:%s1140]
        %s1142 = scalar_lea.vmem %s508, 24
        %v1143 = vlaneseq
        %v1144 = vshrl.u32 %v1143, 7
        %vm1146 = vcmp.lt.s32.totalorder %v1144, 4
        %v1147 = vsel %vm1146, %v1141, %v16
        %v1148 = vlaneseq
        %v1149 = vand.u32 %v1148, 127
        %v1150 = vadd.s32 %v1149, 128
        %vm1151 = vcmp.lt.s32.totalorder %v1150, 144
        %v1152 = vsel %vm1151, %v1147, %v16
        %v1153 = vlaneseq
        %v1154 = vand.u32 %v1153, 127
        %vm1155 = vcmp.lt.s32.totalorder %v1154, 112
        %v1156 = vsel %vm1155, %v1152, %v16
        %1157 = vrot.lane.b32.xlu0 %v1156, 16
        %v1158 = vpop.permute.xlu0 %1157
        %s1159 = scalar_lea.vmem %s521, 24
        %v1160 = vld [vmem:[%s1159] sm:$0xf]
        %v1161 = vlaneseq
        %v1162 = vshrl.u32 %v1161, 7
        %vm1164 = vcmp.lt.s32.totalorder %v1162, 4
        %v1165 = vsel %vm1164, %v1160, %v17
        %v1166 = vlaneseq
        %v1167 = vand.u32 %v1166, 127
        %vm1169 = vcmp.lt.s32.totalorder %v1167, 16
        %v1170 = vsel %vm1169, %v1165, %v17
        %1171 = xla_tuple %v1170, %v1158
        %1172 = xla_tuple %1171
        %v1173 = vmax.f32 %v1170, %v1158
        %1174 = xla_tuple %v1173
        %s1175 = scalar_lea.vmem [#allocation27], 24
        %s1177 = ssub.s32 16, 1
        %1178 = vst [vmem:[%s1175] sm:%s1177] %v1173
        %s1179 = scalar_lea.vmem %s508, 28
        %s1180 = ssub.s32 0, 0
        %p1181 = scmp.lt.s32.totalorder %s1180, 0
        %s1182 = scalar_select %p1181, 0, 255
        %s1183 = sand.u32 15, %s1182
        %s1184 = sand.u32 15, %s1183
        %v1185 = vld [vmem:[%s1179] sm:%s1184]
        %s1186 = scalar_lea.vmem %s508, 28
        %v1187 = vlaneseq
        %v1188 = vshrl.u32 %v1187, 7
        %vm1190 = vcmp.lt.s32.totalorder %v1188, 4
        %v1191 = vsel %vm1190, %v1185, %v16
        %v1192 = vlaneseq
        %v1193 = vand.u32 %v1192, 127
        %v1194 = vadd.s32 %v1193, 128
        %vm1195 = vcmp.lt.s32.totalorder %v1194, 144
        %v1196 = vsel %vm1195, %v1191, %v16
        %v1197 = vlaneseq
        %v1198 = vand.u32 %v1197, 127
        %vm1199 = vcmp.lt.s32.totalorder %v1198, 112
        %v1200 = vsel %vm1199, %v1196, %v16
        %1201 = vrot.lane.b32.xlu0 %v1200, 16
        %v1202 = vpop.permute.xlu0 %1201
        %s1203 = scalar_lea.vmem %s521, 28
        %v1204 = vld [vmem:[%s1203] sm:$0xf]
        %v1205 = vlaneseq
        %v1206 = vshrl.u32 %v1205, 7
        %vm1208 = vcmp.lt.s32.totalorder %v1206, 4
        %v1209 = vsel %vm1208, %v1204, %v17
        %v1210 = vlaneseq
        %v1211 = vand.u32 %v1210, 127
        %vm1213 = vcmp.lt.s32.totalorder %v1211, 16
        %v1214 = vsel %vm1213, %v1209, %v17
        %1215 = xla_tuple %v1214, %v1202
        %1216 = xla_tuple %1215
        %v1217 = vmax.f32 %v1214, %v1202
        %1218 = xla_tuple %v1217
        %s1219 = scalar_lea.vmem [#allocation27], 28
        %s1221 = ssub.s32 16, 1
        %1222 = vst [vmem:[%s1219] sm:%s1221] %v1217
        %v1223 = vld [vmem:[%s464] sm:$0xff]
        %v1225 = vcombine.high %v1223, %v1223
        %v1227 = vunpack.c.l.s4 1966171168
        %v1228 = vunpack.c.0.s8 %v1227
        %v1229 = vlaneseq
        %v1230 = vshrl.u32 %v1229, 7
        %v1231 = vsub.s32 %v1228, %v1230
        %v1232 = vrot.slane %v1223, %v1231
        %v1234 = vunpack.c.l.s4 1966171168
        %v1235 = vunpack.c.0.s8 %v1234
        %v1236 = vlaneseq
        %v1237 = vshrl.u32 %v1236, 7
        %v1238 = vsub.s32 %v1235, %v1237
        %v1239 = vrot.slane %v1225, %v1238
        %v1240 = vcombine.high %v1232, %v1232
        %v1241 = vcombine.high %v1239, %v1239
        %v1243 = vunpack.c.l.s4 1966171168
        %v1244 = vunpack.c.0.s8 %v1243
        %v1245 = vlaneseq
        %v1246 = vshrl.u32 %v1245, 7
        %v1247 = vsub.s32 %v1244, %v1246
        %v1248 = vrot.slane %v1232, %v1247
        %v1250 = vunpack.c.l.s4 1966171168
        %v1251 = vunpack.c.0.s8 %v1250
        %v1252 = vlaneseq
        %v1253 = vshrl.u32 %v1252, 7
        %v1254 = vsub.s32 %v1251, %v1253
        %v1255 = vrot.slane %v1239, %v1254
        %v1257 = vunpack.c.l.s4 1966171168
        %v1258 = vunpack.c.0.s8 %v1257
        %v1259 = vlaneseq
        %v1260 = vshrl.u32 %v1259, 7
        %v1261 = vsub.s32 %v1258, %v1260
        %v1262 = vrot.slane %v1240, %v1261
        %v1264 = vunpack.c.l.s4 1966171168
        %v1265 = vunpack.c.0.s8 %v1264
        %v1266 = vlaneseq
        %v1267 = vshrl.u32 %v1266, 7
        %v1268 = vsub.s32 %v1265, %v1267
        %v1269 = vrot.slane %v1241, %v1268
        %v1270 = vcombine.high %v1248, %v1248
        %v1271 = vcombine.high %v1255, %v1255
        %v1272 = vcombine.high %v1262, %v1262
        %v1273 = vcombine.high %v1269, %v1269
        %v1274 = vld [vmem:[%s460] sm:$0xff]
        %v1276 = vcombine.high %v1274, %v1274
        %v1278 = vunpack.c.l.s4 1966171168
        %v1279 = vunpack.c.0.s8 %v1278
        %v1280 = vlaneseq
        %v1281 = vshrl.u32 %v1280, 7
        %v1282 = vsub.s32 %v1279, %v1281
        %v1283 = vrot.slane %v1274, %v1282
        %v1285 = vunpack.c.l.s4 1966171168
        %v1286 = vunpack.c.0.s8 %v1285
        %v1287 = vlaneseq
        %v1288 = vshrl.u32 %v1287, 7
        %v1289 = vsub.s32 %v1286, %v1288
        %v1290 = vrot.slane %v1276, %v1289
        %v1291 = vcombine.high %v1283, %v1283
        %v1292 = vcombine.high %v1290, %v1290
        %v1294 = vunpack.c.l.s4 1966171168
        %v1295 = vunpack.c.0.s8 %v1294
        %v1296 = vlaneseq
        %v1297 = vshrl.u32 %v1296, 7
        %v1298 = vsub.s32 %v1295, %v1297
        %v1299 = vrot.slane %v1283, %v1298
        %v1301 = vunpack.c.l.s4 1966171168
        %v1302 = vunpack.c.0.s8 %v1301
        %v1303 = vlaneseq
        %v1304 = vshrl.u32 %v1303, 7
        %v1305 = vsub.s32 %v1302, %v1304
        %v1306 = vrot.slane %v1290, %v1305
        %v1308 = vunpack.c.l.s4 1966171168
        %v1309 = vunpack.c.0.s8 %v1308
        %v1310 = vlaneseq
        %v1311 = vshrl.u32 %v1310, 7
        %v1312 = vsub.s32 %v1309, %v1311
        %v1313 = vrot.slane %v1291, %v1312
        %v1315 = vunpack.c.l.s4 1966171168
        %v1316 = vunpack.c.0.s8 %v1315
        %v1317 = vlaneseq
        %v1318 = vshrl.u32 %v1317, 7
        %v1319 = vsub.s32 %v1316, %v1318
        %v1320 = vrot.slane %v1292, %v1319
        %v1321 = vcombine.high %v1299, %v1299
        %v1322 = vcombine.high %v1306, %v1306
        %v1323 = vcombine.high %v1313, %v1313
        %v1324 = vcombine.high %v1320, %v1320
        %v1325 = vld [vmem:[#allocation26] sm:$0xf]
        %v1326 = vld [vmem:[#allocation26 + $0x4] sm:$0xf]
        %v1327 = vld [vmem:[#allocation26 + $0x8] sm:$0xf]
        %v1328 = vld [vmem:[#allocation26 + $0xc] sm:$0xf]
        %v1329 = vld [vmem:[#allocation26 + $0x10] sm:$0xf]
        %v1330 = vld [vmem:[#allocation26 + $0x14] sm:$0xf]
        %v1331 = vld [vmem:[#allocation26 + $0x18] sm:$0xf]
        %v1332 = vld [vmem:[#allocation26 + $0x1c] sm:$0xf]
        %v1333 = vlaneseq
        %v1334 = vshrl.u32 %v1333, 7
        %v1335 = vsub.s32 0, %v1334
        %v1336 = vrot.slane %v1248, %v1335
        %v1337 = vlaneseq
        %v1338 = vshrl.u32 %v1337, 7
        %v1339 = vsub.s32 0, %v1338
        %v1340 = vrot.slane %v1262, %v1339
        %v1341 = vlaneseq
        %v1342 = vshrl.u32 %v1341, 7
        %v1343 = vsub.s32 0, %v1342
        %v1344 = vrot.slane %v1270, %v1343
        %v1345 = vlaneseq
        %v1346 = vshrl.u32 %v1345, 7
        %v1347 = vsub.s32 0, %v1346
        %v1348 = vrot.slane %v1272, %v1347
        %v1349 = vlaneseq
        %v1350 = vshrl.u32 %v1349, 7
        %v1351 = vsub.s32 0, %v1350
        %v1352 = vrot.slane %v1255, %v1351
        %v1353 = vlaneseq
        %v1354 = vshrl.u32 %v1353, 7
        %v1355 = vsub.s32 0, %v1354
        %v1356 = vrot.slane %v1269, %v1355
        %v1357 = vlaneseq
        %v1358 = vshrl.u32 %v1357, 7
        %v1359 = vsub.s32 0, %v1358
        %v1360 = vrot.slane %v1271, %v1359
        %v1361 = vlaneseq
        %v1362 = vshrl.u32 %v1361, 7
        %v1363 = vsub.s32 0, %v1362
        %v1364 = vrot.slane %v1273, %v1363
        %v1373 = vmul.f32 %v1325, %v1336
        %v1374 = vmul.f32 %v1326, %v1340
        %v1375 = vmul.f32 %v1327, %v1344
        %v1376 = vmul.f32 %v1328, %v1348
        %v1377 = vmul.f32 %v1329, %v1352
        %v1378 = vmul.f32 %v1330, %v1356
        %v1379 = vmul.f32 %v1331, %v1360
        %v1380 = vmul.f32 %v1332, %v1364
        %v1381 = vlaneseq
        %v1382 = vshrl.u32 %v1381, 7
        %v1383 = vsub.s32 0, %v1382
        %v1384 = vrot.slane %v1299, %v1383
        %v1385 = vlaneseq
        %v1386 = vshrl.u32 %v1385, 7
        %v1387 = vsub.s32 0, %v1386
        %v1388 = vrot.slane %v1313, %v1387
        %v1389 = vlaneseq
        %v1390 = vshrl.u32 %v1389, 7
        %v1391 = vsub.s32 0, %v1390
        %v1392 = vrot.slane %v1321, %v1391
        %v1393 = vlaneseq
        %v1394 = vshrl.u32 %v1393, 7
        %v1395 = vsub.s32 0, %v1394
        %v1396 = vrot.slane %v1323, %v1395
        %v1397 = vlaneseq
        %v1398 = vshrl.u32 %v1397, 7
        %v1399 = vsub.s32 0, %v1398
        %v1400 = vrot.slane %v1306, %v1399
        %v1401 = vlaneseq
        %v1402 = vshrl.u32 %v1401, 7
        %v1403 = vsub.s32 0, %v1402
        %v1404 = vrot.slane %v1320, %v1403
        %v1405 = vlaneseq
        %v1406 = vshrl.u32 %v1405, 7
        %v1407 = vsub.s32 0, %v1406
        %v1408 = vrot.slane %v1322, %v1407
        %v1409 = vlaneseq
        %v1410 = vshrl.u32 %v1409, 7
        %v1411 = vsub.s32 0, %v1410
        %v1412 = vrot.slane %v1324, %v1411
        %v1421 = vmul.f32 %v1325, %v1384
        %v1422 = vmul.f32 %v1326, %v1388
        %v1423 = vmul.f32 %v1327, %v1392
        %v1424 = vmul.f32 %v1328, %v1396
        %v1425 = vmul.f32 %v1329, %v1400
        %v1426 = vmul.f32 %v1330, %v1404
        %v1427 = vmul.f32 %v1331, %v1408
        %v1428 = vmul.f32 %v1332, %v1412
        %1437 = vrot.lane.b32.xlu0 %v1421, 112
        %v1438 = vpop.permute.xlu0 %1437
        %1439 = vrot.lane.b32.xlu0 %v1422, 112
        %v1440 = vpop.permute.xlu0 %1439
        %1441 = vrot.lane.b32.xlu0 %v1423, 112
        %v1442 = vpop.permute.xlu0 %1441
        %1443 = vrot.lane.b32.xlu0 %v1424, 112
        %v1444 = vpop.permute.xlu0 %1443
        %1445 = vrot.lane.b32.xlu0 %v1425, 112
        %v1446 = vpop.permute.xlu0 %1445
        %1447 = vrot.lane.b32.xlu0 %v1426, 112
        %v1448 = vpop.permute.xlu0 %1447
        %1449 = vrot.lane.b32.xlu0 %v1427, 112
        %v1450 = vpop.permute.xlu0 %1449
        %1451 = vrot.lane.b32.xlu0 %v1428, 112
        %v1452 = vpop.permute.xlu0 %1451
        %v1461 = vsub.f32 %v1373, %v1438
        %v1462 = vsub.f32 %v1374, %v1440
        %v1463 = vsub.f32 %v1375, %v1442
        %v1464 = vsub.f32 %v1376, %v1444
        %v1465 = vsub.f32 %v1377, %v1446
        %v1466 = vsub.f32 %v1378, %v1448
        %v1467 = vsub.f32 %v1379, %v1450
        %v1468 = vsub.f32 %v1380, %v1452
        %vm1469 = vcmask 125952
        %1470 = vst.msk [vmem:[%s449] sm:$0xf] %vm1469, %v1461
        %1471 = vst.msk [vmem:[%s449 + $0x4] sm:$0xf] %vm1469, %v1462
        %1472 = vst.msk [vmem:[%s449 + $0x8] sm:$0xf] %vm1469, %v1463
        %1473 = vst.msk [vmem:[%s449 + $0xc] sm:$0xf] %vm1469, %v1464
        %1474 = vst.msk [vmem:[%s449 + $0x10] sm:$0xf] %vm1469, %v1465
        %1475 = vst.msk [vmem:[%s449 + $0x14] sm:$0xf] %vm1469, %v1466
        %1476 = vst.msk [vmem:[%s449 + $0x18] sm:$0xf] %vm1469, %v1467
        %1477 = vst.msk [vmem:[%s449 + $0x1c] sm:$0xf] %vm1469, %v1468
        %1478 = vrot.lane.b32.xlu0 %v1336, 16
        %v1479 = vpop.permute.xlu0 %1478
        %1480 = vrot.lane.b32.xlu0 %v1340, 16
        %v1481 = vpop.permute.xlu0 %1480
        %1482 = vrot.lane.b32.xlu0 %v1344, 16
        %v1483 = vpop.permute.xlu0 %1482
        %1484 = vrot.lane.b32.xlu0 %v1348, 16
        %v1485 = vpop.permute.xlu0 %1484
        %1486 = vrot.lane.b32.xlu0 %v1352, 16
        %v1487 = vpop.permute.xlu0 %1486
        %1488 = vrot.lane.b32.xlu0 %v1356, 16
        %v1489 = vpop.permute.xlu0 %1488
        %1490 = vrot.lane.b32.xlu0 %v1360, 16
        %v1491 = vpop.permute.xlu0 %1490
        %1492 = vrot.lane.b32.xlu0 %v1364, 16
        %v1493 = vpop.permute.xlu0 %1492
        %v1502 = vmul.f32 %v1325, %v1479
        %v1503 = vmul.f32 %v1326, %v1481
        %v1504 = vmul.f32 %v1327, %v1483
        %v1505 = vmul.f32 %v1328, %v1485
        %v1506 = vmul.f32 %v1329, %v1487
        %v1507 = vmul.f32 %v1330, %v1489
        %v1508 = vmul.f32 %v1331, %v1491
        %v1509 = vmul.f32 %v1332, %v1493
        %1510 = vrot.lane.b32.xlu0 %v1384, 112
        %v1511 = vpop.permute.xlu0 %1510
        %1512 = vrot.lane.b32.xlu0 %v1388, 112
        %v1513 = vpop.permute.xlu0 %1512
        %1514 = vrot.lane.b32.xlu0 %v1392, 112
        %v1515 = vpop.permute.xlu0 %1514
        %1516 = vrot.lane.b32.xlu0 %v1396, 112
        %v1517 = vpop.permute.xlu0 %1516
        %1518 = vrot.lane.b32.xlu0 %v1400, 112
        %v1519 = vpop.permute.xlu0 %1518
        %1520 = vrot.lane.b32.xlu0 %v1404, 112
        %v1521 = vpop.permute.xlu0 %1520
        %1522 = vrot.lane.b32.xlu0 %v1408, 112
        %v1523 = vpop.permute.xlu0 %1522
        %1524 = vrot.lane.b32.xlu0 %v1412, 112
        %v1525 = vpop.permute.xlu0 %1524
        %v1534 = vmul.f32 %v1325, %v1511
        %v1535 = vmul.f32 %v1326, %v1513
        %v1536 = vmul.f32 %v1327, %v1515
        %v1537 = vmul.f32 %v1328, %v1517
        %v1538 = vmul.f32 %v1329, %v1519
        %v1539 = vmul.f32 %v1330, %v1521
        %v1540 = vmul.f32 %v1331, %v1523
        %v1541 = vmul.f32 %v1332, %v1525
        %1550 = vrot.lane.b32.xlu0 %v1534, 16
        %v1551 = vpop.permute.xlu0 %1550
        %1552 = vrot.lane.b32.xlu0 %v1535, 16
        %v1553 = vpop.permute.xlu0 %1552
        %1554 = vrot.lane.b32.xlu0 %v1536, 16
        %v1555 = vpop.permute.xlu0 %1554
        %1556 = vrot.lane.b32.xlu0 %v1537, 16
        %v1557 = vpop.permute.xlu0 %1556
        %1558 = vrot.lane.b32.xlu0 %v1538, 16
        %v1559 = vpop.permute.xlu0 %1558
        %1560 = vrot.lane.b32.xlu0 %v1539, 16
        %v1561 = vpop.permute.xlu0 %1560
        %1562 = vrot.lane.b32.xlu0 %v1540, 16
        %v1563 = vpop.permute.xlu0 %1562
        %1564 = vrot.lane.b32.xlu0 %v1541, 16
        %v1565 = vpop.permute.xlu0 %1564
        %v1574 = vadd.f32 %v1502, %v1551
        %v1575 = vadd.f32 %v1503, %v1553
        %v1576 = vadd.f32 %v1504, %v1555
        %v1577 = vadd.f32 %v1505, %v1557
        %v1578 = vadd.f32 %v1506, %v1559
        %v1579 = vadd.f32 %v1507, %v1561
        %v1580 = vadd.f32 %v1508, %v1563
        %v1581 = vadd.f32 %v1509, %v1565
        %vm1582 = vcmask 257152
        %1583 = vst.msk [vmem:[%s449] sm:$0xf] %vm1582, %v1574
        %1584 = vst.msk [vmem:[%s449 + $0x4] sm:$0xf] %vm1582, %v1575
        %1585 = vst.msk [vmem:[%s449 + $0x8] sm:$0xf] %vm1582, %v1576
        %1586 = vst.msk [vmem:[%s449 + $0xc] sm:$0xf] %vm1582, %v1577
        %1587 = vst.msk [vmem:[%s449 + $0x10] sm:$0xf] %vm1582, %v1578
        %1588 = vst.msk [vmem:[%s449 + $0x14] sm:$0xf] %vm1582, %v1579
        %1589 = vst.msk [vmem:[%s449 + $0x18] sm:$0xf] %vm1582, %v1580
        %1590 = vst.msk [vmem:[%s449 + $0x1c] sm:$0xf] %vm1582, %v1581
        %v1591 = vld [vmem:[#allocation27] sm:$0xf]
        %v1592 = vld [vmem:[#allocation27 + $0x4] sm:$0xf]
        %v1593 = vld [vmem:[#allocation27 + $0x8] sm:$0xf]
        %v1594 = vld [vmem:[#allocation27 + $0xc] sm:$0xf]
        %v1595 = vld [vmem:[#allocation27 + $0x10] sm:$0xf]
        %v1596 = vld [vmem:[#allocation27 + $0x14] sm:$0xf]
        %v1597 = vld [vmem:[#allocation27 + $0x18] sm:$0xf]
        %v1598 = vld [vmem:[#allocation27 + $0x1c] sm:$0xf]
        %v1599 = vmul.f32 %v1591, %v1336
        %v1600 = vmul.f32 %v1592, %v1340
        %v1601 = vmul.f32 %v1593, %v1344
        %v1602 = vmul.f32 %v1594, %v1348
        %v1603 = vmul.f32 %v1595, %v1352
        %v1604 = vmul.f32 %v1596, %v1356
        %v1605 = vmul.f32 %v1597, %v1360
        %v1606 = vmul.f32 %v1598, %v1364
        %v1607 = vmul.f32 %v1591, %v1384
        %v1608 = vmul.f32 %v1592, %v1388
        %v1609 = vmul.f32 %v1593, %v1392
        %v1610 = vmul.f32 %v1594, %v1396
        %v1611 = vmul.f32 %v1595, %v1400
        %v1612 = vmul.f32 %v1596, %v1404
        %v1613 = vmul.f32 %v1597, %v1408
        %v1614 = vmul.f32 %v1598, %v1412
        %1623 = vrot.lane.b32.xlu0 %v1607, 112
        %v1624 = vpop.permute.xlu0 %1623
        %1625 = vrot.lane.b32.xlu0 %v1608, 112
        %v1626 = vpop.permute.xlu0 %1625
        %1627 = vrot.lane.b32.xlu0 %v1609, 112
        %v1628 = vpop.permute.xlu0 %1627
        %1629 = vrot.lane.b32.xlu0 %v1610, 112
        %v1630 = vpop.permute.xlu0 %1629
        %1631 = vrot.lane.b32.xlu0 %v1611, 112
        %v1632 = vpop.permute.xlu0 %1631
        %1633 = vrot.lane.b32.xlu0 %v1612, 112
        %v1634 = vpop.permute.xlu0 %1633
        %1635 = vrot.lane.b32.xlu0 %v1613, 112
        %v1636 = vpop.permute.xlu0 %1635
        %1637 = vrot.lane.b32.xlu0 %v1614, 112
        %v1638 = vpop.permute.xlu0 %1637
        %v1647 = vsub.f32 %v1599, %v1624
        %v1648 = vsub.f32 %v1600, %v1626
        %v1649 = vsub.f32 %v1601, %v1628
        %v1650 = vsub.f32 %v1602, %v1630
        %v1651 = vsub.f32 %v1603, %v1632
        %v1652 = vsub.f32 %v1604, %v1634
        %v1653 = vsub.f32 %v1605, %v1636
        %v1654 = vsub.f32 %v1606, %v1638
        %1655 = vst.msk [vmem:[%s456] sm:$0xf] %vm1469, %v1647
        %1656 = vst.msk [vmem:[%s456 + $0x4] sm:$0xf] %vm1469, %v1648
        %1657 = vst.msk [vmem:[%s456 + $0x8] sm:$0xf] %vm1469, %v1649
        %1658 = vst.msk [vmem:[%s456 + $0xc] sm:$0xf] %vm1469, %v1650
        %1659 = vst.msk [vmem:[%s456 + $0x10] sm:$0xf] %vm1469, %v1651
        %1660 = vst.msk [vmem:[%s456 + $0x14] sm:$0xf] %vm1469, %v1652
        %1661 = vst.msk [vmem:[%s456 + $0x18] sm:$0xf] %vm1469, %v1653
        %1662 = vst.msk [vmem:[%s456 + $0x1c] sm:$0xf] %vm1469, %v1654
        %v1663 = vmul.f32 %v1591, %v1479
        %v1664 = vmul.f32 %v1592, %v1481
        %v1665 = vmul.f32 %v1593, %v1483
        %v1666 = vmul.f32 %v1594, %v1485
        %v1667 = vmul.f32 %v1595, %v1487
        %v1668 = vmul.f32 %v1596, %v1489
        %v1669 = vmul.f32 %v1597, %v1491
        %v1670 = vmul.f32 %v1598, %v1493
        %v1671 = vmul.f32 %v1591, %v1511
        %v1672 = vmul.f32 %v1592, %v1513
        %v1673 = vmul.f32 %v1593, %v1515
        %v1674 = vmul.f32 %v1594, %v1517
        %v1675 = vmul.f32 %v1595, %v1519
        %v1676 = vmul.f32 %v1596, %v1521
        %v1677 = vmul.f32 %v1597, %v1523
        %v1678 = vmul.f32 %v1598, %v1525
        %1687 = vrot.lane.b32.xlu0 %v1671, 16
        %v1688 = vpop.permute.xlu0 %1687
        %1689 = vrot.lane.b32.xlu0 %v1672, 16
        %v1690 = vpop.permute.xlu0 %1689
        %1691 = vrot.lane.b32.xlu0 %v1673, 16
        %v1692 = vpop.permute.xlu0 %1691
        %1693 = vrot.lane.b32.xlu0 %v1674, 16
        %v1694 = vpop.permute.xlu0 %1693
        %1695 = vrot.lane.b32.xlu0 %v1675, 16
        %v1696 = vpop.permute.xlu0 %1695
        %1697 = vrot.lane.b32.xlu0 %v1676, 16
        %v1698 = vpop.permute.xlu0 %1697
        %1699 = vrot.lane.b32.xlu0 %v1677, 16
        %v1700 = vpop.permute.xlu0 %1699
        %1701 = vrot.lane.b32.xlu0 %v1678, 16
        %v1702 = vpop.permute.xlu0 %1701
        %v1711 = vadd.f32 %v1663, %v1688
        %v1712 = vadd.f32 %v1664, %v1690
        %v1713 = vadd.f32 %v1665, %v1692
        %v1714 = vadd.f32 %v1666, %v1694
        %v1715 = vadd.f32 %v1667, %v1696
        %v1716 = vadd.f32 %v1668, %v1698
        %v1717 = vadd.f32 %v1669, %v1700
        %v1718 = vadd.f32 %v1670, %v1702
        %1719 = vst.msk [vmem:[%s456] sm:$0xf] %vm1582, %v1711
        %1720 = vst.msk [vmem:[%s456 + $0x4] sm:$0xf] %vm1582, %v1712
        %1721 = vst.msk [vmem:[%s456 + $0x8] sm:$0xf] %vm1582, %v1713
        %1722 = vst.msk [vmem:[%s456 + $0xc] sm:$0xf] %vm1582, %v1714
        %1723 = vst.msk [vmem:[%s456 + $0x10] sm:$0xf] %vm1582, %v1715
        %1724 = vst.msk [vmem:[%s456 + $0x14] sm:$0xf] %vm1582, %v1716
        %1725 = vst.msk [vmem:[%s456 + $0x18] sm:$0xf] %vm1582, %v1717
        %1726 = vst.msk [vmem:[%s456 + $0x1c] sm:$0xf] %vm1582, %v1718
        %s1727 = sand.u32 %s224, 1
        %s1728 = scalar_lea.sflag [#allocation23], %s1727
        %s1729 = sand.u32 %s224, 1
        %s1730 = smul.addr %s1729, 32
        %s1731 = scalar_lea.vmem [#allocation22], %s1730
        %s1732 = sand.u32 %s252, 1
        %s1733 = scalar_lea.sflag [#allocation25], %s1732
        %s1734 = sand.u32 %s252, 1
        %s1735 = smul.addr %s1734, 32
        %s1736 = scalar_lea.vmem [#allocation24], %s1735
        // Predicated region
        $region45: #{pos_encoding_forward.2} parent=43 // pred_check
          %p1737 = pneg %p234
        $region46: #{pos_encoding_forward.2} parent=43 // pred_check_branch
          %1739 = sbr.rel (%p1737) target = $region48
        $region47: #{pos_encoding_forward.2} parent=43 // pred_region
          %s1740 = smul.u32 8, %s35
          %s1742 = ssub.s32 512, 512
          %1743 = vsyncadd %s1728, %s1742
          %s1744 = smul.addr %s34, 8
          %s1745 = sadd.s32 %s1740, %s1744
          %s1746 = smul.addr %s1745, 64
          %s1747 = scalar_lea.hbm %s7, %s1746
          %s1748 = sshll.u32 %s1731, 4
          %s1749 = int_to_ptr.vmem [resolvable:$true] %s1748
          %1754 = dma.vmem_to_hbm [thread:$0]  %s1749, 512, %s1747, %s1728, 64, 64, 4
        $region48: #{pos_encoding_forward.2} parent=43 // pred_fallthru
          _
        // Predicated region
        $region49: #{pos_encoding_forward.2} parent=43 // pred_check
          %p1755 = pneg %p262
        $region50: #{pos_encoding_forward.2} parent=43 // pred_check_branch
          %1757 = sbr.rel (%p1755) target = $region52
        $region51: #{pos_encoding_forward.2} parent=43 // pred_region
          %s1758 = smul.u32 8, %s35
          %s1760 = ssub.s32 512, 512
          %1761 = vsyncadd %s1733, %s1760
          %s1762 = smul.addr %s34, 8
          %s1763 = sadd.s32 %s1758, %s1762
          %s1764 = smul.addr %s1763, 64
          %s1765 = scalar_lea.hbm %s8, %s1764
          %s1766 = sshll.u32 %s1736, 4
          %s1767 = int_to_ptr.vmem [resolvable:$true] %s1766
          %1772 = dma.vmem_to_hbm [thread:$0]  %s1767, 512, %s1765, %s1733, 64, 64, 4
        $region52: #{pos_encoding_forward.2} parent=43 // pred_fallthru
          _
      $region44: #{pos_encoding_forward.2} parent=5 // pred_fallthru
        _
      %p1773 = scmp.le.s32.totalorder 2, %s25
      // Predicated region
      $region53: #{pos_encoding_forward.2} parent=5 // pred_check
        %p1774 = pneg %p1773
      $region54: #{pos_encoding_forward.2} parent=5 // pred_check_branch
        %1776 = sbr.rel (%p1774) target = $region56
      $region55: #{pos_encoding_forward.2} parent=5 // pred_region
        %s1777 = ssub.s32 %s25, 2
        // Predicated region
        $region57: #{pos_encoding_forward.2} parent=55 // pred_check
          %p1778 = pneg %p240
        $region58: #{pos_encoding_forward.2} parent=55 // pred_check_branch
          %1780 = sbr.rel (%p1778) target = $region60
        $region59: #{pos_encoding_forward.2} parent=55 // pred_region
          %s1781 = sand.u32 %s225, 1
          %s1782 = scalar_lea.sflag [#allocation23], %s1781
          %s1783 = sand.u32 %s225, 1
          %s1784 = smul.addr %s1783, 32
          %s1785 = scalar_lea.vmem [#allocation22], %s1784
          %1786 = dma.done %s1782, 512
        $region60: #{pos_encoding_forward.2} parent=55 // pred_fallthru
          _
        // Predicated region
        $region61: #{pos_encoding_forward.2} parent=55 // pred_check
          %p1787 = pneg %p268
        $region62: #{pos_encoding_forward.2} parent=55 // pred_check_branch
          %1789 = sbr.rel (%p1787) target = $region64
        $region63: #{pos_encoding_forward.2} parent=55 // pred_region
          %s1790 = sand.u32 %s253, 1
          %s1791 = scalar_lea.sflag [#allocation25], %s1790
          %s1792 = sand.u32 %s253, 1
          %s1793 = smul.addr %s1792, 32
          %s1794 = scalar_lea.vmem [#allocation24], %s1793
          %1795 = dma.done %s1791, 512
        $region64: #{pos_encoding_forward.2} parent=55 // pred_fallthru
          _
      $region56: #{pos_encoding_forward.2} parent=5 // pred_fallthru
        _
    $region6: #{pos_encoding_forward.2} parent=1 // loop_footer
      %s29 = sadd.s32 1, %s25
    $region7: #{pos_encoding_forward.2} parent=1 // loop_footer_branch
      %24 = sbr.rel target = $region3
    $region8: #{pos_encoding_forward.2} parent=1 // loop_exit
      _
    %1796 = vsyncpa [#allocation23], 1
    %s1797 = scalar_lea.sflag [#allocation23], 1
    %1798 = vsyncpa %s1797, 1
    %1799 = vsyncpa [#allocation25], 1
    %s1800 = scalar_lea.sflag [#allocation25], 1
    %1801 = vsyncpa %s1800, 1

</llo_original>
